<compile_context>
chip_gen: v6e
topology: v6e:2x2x1
jax: 0.10.0
libtpu: 0.0.40
codegen_flags: <defaults>
</compile_context>

<pallas_src>
import jax
import jax.numpy as jnp
from jax.experimental import pallas as pl
from jax.experimental.pallas import tpu as pltpu

Z_DIM = 10
IN_DIM = Z_DIM * 10   # 100
H1 = 256
H2 = 512
OUT_DIM = 784

TILE_B_MAX = 1024     # ~25 MiB total VMEM at this tile; fits v7x's 64 MiB easily


def _round_up(n: int, m: int) -> int:
    return ((n + m - 1) // m) * m


def _choose_tile_b(B: int) -> int:
    """Pick the batch tile.

    - Tiny/latency batches (<=128): a single tile rounded to bf16 sublane packing.
    - Larger batches: multiples of 128 (v5e 128x128 MXU), at least 2 grid steps so
      the "parallel" batch axis shards across v7x's two TensorCores, capped so the
      tile (plus temps / double-buffered IO) stays well inside VMEM.
    """
    if B <= 128:
        return _round_up(B, 16)
    half = _round_up(-(-B // 2), 128)
    return min(TILE_B_MAX, half)


def _decoder_kernel(x_ref, w1_ref, b1_ref, w2_ref, b2_ref, w3_ref, b3_ref, o_ref):
    """Fused 3-layer MLP tile: bf16 MXU matmuls, f32 accumulate / bias / ReLU."""
    # x arrives as f32 (tile_b, 100); cast to bf16 in-kernel (cheap VPU work,
    # hidden under the matmuls) so the wrapper does no extra HBM round trip.
    x = x_ref[...].astype(jnp.bfloat16)

    # Linear(100 -> 256) + ReLU
    h = jnp.dot(x, w1_ref[...], preferred_element_type=jnp.float32) + b1_ref[...]
    h = jnp.maximum(h, 0.0).astype(jnp.bfloat16)

    # Linear(256 -> 512) + ReLU
    h = jnp.dot(h, w2_ref[...], preferred_element_type=jnp.float32) + b2_ref[...]
    h = jnp.maximum(h, 0.0).astype(jnp.bfloat16)

    # Linear(512 -> 784) — no activation (matches the PyTorch Sequential)
    out = jnp.dot(h, w3_ref[...], preferred_element_type=jnp.float32) + b3_ref[...]
    o_ref[...] = out.astype(o_ref.dtype)


@jax.jit
def decoder_forward(x, w1, b1, w2, b2, w3, b3):
    """x: (B, 100) f32.  Weights bf16 in (in, out) layout (see prepare_params),
    biases f32 (1, out).  Returns (B, 784) f32."""
    B = x.shape[0]
    tile_b = _choose_tile_b(B)
    B_pad = _round_up(B, tile_b)

    # Only batch padding remains in the wrapper (no-op when B is a tile multiple).
    x_p = jnp.pad(x, ((0, B_pad - B), (0, 0)))

    grid = (B_pad // tile_b,)

    # Weights/biases: constant index_map -> VMEM-resident across the whole grid.
    const = lambda i: (0, 0)
    in_specs = [
        pl.BlockSpec((tile_b, IN_DIM), lambda i: (i, 0)),   # x tile (pipelined)
        pl.BlockSpec((IN_DIM, H1), const),                  # w1  (full-dim block)
        pl.BlockSpec((1, H1), const),                       # b1
        pl.BlockSpec((H1, H2), const),                      # w2
        pl.BlockSpec((1, H2), const),                       # b2
        pl.BlockSpec((H2, OUT_DIM), const),                 # w3  (full-dim block)
        pl.BlockSpec((1, OUT_DIM), const),                  # b3
    ]
    out_specs = pl.BlockSpec((tile_b, OUT_DIM), lambda i: (i, 0))

    # --- VMEM budget: double-buffered x/out tiles + resident weights + temps ---
    weight_bytes = (w1.size + w2.size + w3.size) * 2            # bf16
    bias_bytes = (b1.size + b2.size + b3.size) * 4
    io_bytes = 2 * tile_b * IN_DIM * 4 + 2 * tile_b * OUT_DIM * 4
    tmp_bytes = tile_b * (H1 + H2 + OUT_DIM) * 4 + tile_b * (H1 + H2) * 2
    vmem_limit = min(
        _round_up(2 * (weight_bytes + bias_bytes) + io_bytes + tmp_bytes + (8 << 20),
                  1 << 20),
        48 << 20)   # keep headroom on v7x's 64 MiB VMEM

    flops = 2 * B_pad * (IN_DIM * H1 + H1 * H2 + H2 * OUT_DIM)
    bytes_accessed = (B_pad * IN_DIM * 4 + weight_bytes + bias_bytes
                      + B_pad * OUT_DIM * 4)

    out_padded = pl.pallas_call(
        _decoder_kernel,
        out_shape=jax.ShapeDtypeStruct((B_pad, OUT_DIM), jnp.float32),
        grid=grid,
        in_specs=in_specs,
        out_specs=out_specs,
        compiler_params=pltpu.CompilerParams(
            dimension_semantics=("parallel",),
            vmem_limit_bytes=int(vmem_limit),
        ),
        cost_estimate=pl.CostEstimate(
            flops=int(flops), transcendentals=0, bytes_accessed=int(bytes_accessed)),
    )(x_p, w1, b1, w2, b2, w3, b3)

    # Batch slice only (no lane slice); no-op when B is already a tile multiple.
    return out_padded if B_pad == B else out_padded[:B]


def prepare_params(w1, b1, w2, b2, w3, b3):
    """One-time prep (hoisted out of the forward): weights to bf16, (in, out)
    layout, biases kept f32 as (1, out)."""
    bf = jnp.bfloat16
    return (w1.astype(bf), b1.astype(jnp.float32),
            w2.astype(bf), b2.astype(jnp.float32),
            w3.astype(bf), b3.astype(jnp.float32))


def init_params(key):
    """Deterministic init mimicking PyTorch nn.Linear default U(-1/sqrt(fan_in), +)."""
    keys = jax.random.split(key, 6)

    def linear(kw, kb, fan_in, fan_out):
        bound = 1.0 / jnp.sqrt(fan_in)
        w = jax.random.uniform(kw, (fan_in, fan_out), jnp.float32, -bound, bound)
        b = jax.random.uniform(kb, (1, fan_out), jnp.float32, -bound, bound)
        return w, b

    w1, b1 = linear(keys[0], keys[1], IN_DIM, H1)
    w2, b2 = linear(keys[2], keys[3], H1, H2)
    w3, b3 = linear(keys[4], keys[5], H2, OUT_DIM)
    return w1, b1, w2, b2, w3, b3


def decoder_reference_f32(x, w1, b1, w2, b2, w3, b3):
    h = jnp.maximum(x @ w1 + b1, 0.0)
    h = jnp.maximum(h @ w2 + b2, 0.0)
    return h @ w3 + b3


def decoder_reference_bf16(x, w1, b1, w2, b2, w3, b3):
    """Reference matching the kernel's bf16-feed / f32-accumulate numerics."""
    bf = jnp.bfloat16
    f32 = jnp.float32
    h = jnp.dot(x.astype(bf), w1.astype(bf), preferred_element_type=f32) + b1
    h = jnp.maximum(h, 0.0).astype(bf)
    h = jnp.dot(h, w2.astype(bf), preferred_element_type=f32) + b2
    h = jnp.maximum(h, 0.0).astype(bf)
    return jnp.dot(h, w3.astype(bf), preferred_element_type=f32) + b3


if __name__ == "__main__":
    key = jax.random.PRNGKey(0)
    k_x, k_p = jax.random.split(key)

    batch = 2
    x = jax.random.normal(k_x, (batch, IN_DIM), jnp.float32)
    params_f32 = init_params(k_p)
    params = prepare_params(*params_f32)          # one-time weight prep (hoisted)

    out = jax.block_until_ready(decoder_forward(x, *params))
    assert out.shape == (batch, OUT_DIM), out.shape
    assert out.dtype == jnp.float32, out.dtype

    # Tight check vs a bf16-feed reference (same numerics as the kernel).
    ref_bf16 = decoder_reference_bf16(x, *params_f32)
    assert jnp.allclose(out, ref_bf16, atol=5e-3, rtol=5e-3), "mismatch vs bf16 reference"

    # Looser check vs the pure-f32 PyTorch-equivalent reference (bf16 feed error).
    ref_f32 = decoder_reference_f32(x, *params_f32)
    assert jnp.allclose(out, ref_f32, atol=5e-2, rtol=5e-2), "mismatch vs f32 reference"

    print("KERNEL_OK")
</pallas_src>

<mosaic_0001>
module attributes {stable_mosaic.version = 11 : i64} {
  func.func @_decoder_kernel(%arg0: i32, %arg1: memref<16x100xf32, #tpu.memory_space<vmem>>, %arg2: memref<100x256xbf16, #tpu.memory_space<vmem>>, %arg3: memref<1x256xf32, #tpu.memory_space<vmem>>, %arg4: memref<256x512xbf16, #tpu.memory_space<vmem>>, %arg5: memref<1x512xf32, #tpu.memory_space<vmem>>, %arg6: memref<512x784xbf16, #tpu.memory_space<vmem>>, %arg7: memref<1x784xf32, #tpu.memory_space<vmem>>, %arg8: memref<16x784xf32, #tpu.memory_space<vmem>>) attributes {dimension_semantics = [#tpu.dimension_semantics<parallel>], iteration_bounds = array<i64: 1>, scalar_prefetch = 0 : i64, scratch_operands = 0 : i64, tpu.core_type = #tpu.core_type<tc>, window_params = [{transform_indices = @transform_0, window_bounds = array<i64: 16, 100>}, {pipeline_mode = #tpu.pipeline_mode<synchronous>, transform_indices = @transform_1, window_bounds = array<i64: 100, 256>}, {pipeline_mode = #tpu.pipeline_mode<synchronous>, transform_indices = @transform_2, window_bounds = array<i64: 1, 256>}, {pipeline_mode = #tpu.pipeline_mode<synchronous>, transform_indices = @transform_3, window_bounds = array<i64: 256, 512>}, {pipeline_mode = #tpu.pipeline_mode<synchronous>, transform_indices = @transform_4, window_bounds = array<i64: 1, 512>}, {pipeline_mode = #tpu.pipeline_mode<synchronous>, transform_indices = @transform_5, window_bounds = array<i64: 512, 784>}, {pipeline_mode = #tpu.pipeline_mode<synchronous>, transform_indices = @transform_6, window_bounds = array<i64: 1, 784>}, {transform_indices = @transform_7, window_bounds = array<i64: 16, 784>}]} {
    %c0 = arith.constant 0 : index
    %c0_0 = arith.constant 0 : index
    %0 = vector.load %arg1[%c0, %c0_0] : memref<16x100xf32, #tpu.memory_space<vmem>>, vector<16x100xf32>
    %1 = arith.truncf %0 : vector<16x100xf32> to vector<16x100xbf16>
    %c0_1 = arith.constant 0 : index
    %c0_2 = arith.constant 0 : index
    %2 = vector.load %arg2[%c0_1, %c0_2] : memref<100x256xbf16, #tpu.memory_space<vmem>>, vector<100x256xbf16>
    %cst = arith.constant dense<0.000000e+00> : vector<16x256xf32>
    %3 = tpu.matmul %1, %2, %cst {dimension_numbers = #tpu.dot_dimension_numbers<[1], [0], [0], [1], [0, 0, 1, 1], [], []>} : vector<16x100xbf16>, vector<100x256xbf16>, vector<16x256xf32> -> vector<16x256xf32>
    %c0_3 = arith.constant 0 : index
    %c0_4 = arith.constant 0 : index
    %4 = vector.load %arg3[%c0_3, %c0_4] : memref<1x256xf32, #tpu.memory_space<vmem>>, vector<1x256xf32>
    %5 = vector.broadcast %4 : vector<1x256xf32> to vector<16x256xf32>
    %6 = arith.addf %3, %5 : vector<16x256xf32>
    %cst_5 = arith.constant 0.000000e+00 : f32
    %7 = vector.broadcast %cst_5 : f32 to vector<16x256xf32>
    %8 = arith.maximumf %6, %7 : vector<16x256xf32>
    %9 = arith.truncf %8 : vector<16x256xf32> to vector<16x256xbf16>
    %c0_6 = arith.constant 0 : index
    %c0_7 = arith.constant 0 : index
    %10 = vector.load %arg4[%c0_6, %c0_7] : memref<256x512xbf16, #tpu.memory_space<vmem>>, vector<256x512xbf16>
    %cst_8 = arith.constant dense<0.000000e+00> : vector<16x512xf32>
    %11 = tpu.matmul %9, %10, %cst_8 {dimension_numbers = #tpu.dot_dimension_numbers<[1], [0], [0], [1], [0, 0, 1, 1], [], []>} : vector<16x256xbf16>, vector<256x512xbf16>, vector<16x512xf32> -> vector<16x512xf32>
    %c0_9 = arith.constant 0 : index
    %c0_10 = arith.constant 0 : index
    %12 = vector.load %arg5[%c0_9, %c0_10] : memref<1x512xf32, #tpu.memory_space<vmem>>, vector<1x512xf32>
    %13 = vector.broadcast %12 : vector<1x512xf32> to vector<16x512xf32>
    %14 = arith.addf %11, %13 : vector<16x512xf32>
    %cst_11 = arith.constant 0.000000e+00 : f32
    %15 = vector.broadcast %cst_11 : f32 to vector<16x512xf32>
    %16 = arith.maximumf %14, %15 : vector<16x512xf32>
    %17 = arith.truncf %16 : vector<16x512xf32> to vector<16x512xbf16>
    %c0_12 = arith.constant 0 : index
    %c0_13 = arith.constant 0 : index
    %18 = vector.load %arg6[%c0_12, %c0_13] : memref<512x784xbf16, #tpu.memory_space<vmem>>, vector<512x784xbf16>
    %cst_14 = arith.constant dense<0.000000e+00> : vector<16x784xf32>
    %19 = tpu.matmul %17, %18, %cst_14 {dimension_numbers = #tpu.dot_dimension_numbers<[1], [0], [0], [1], [0, 0, 1, 1], [], []>} : vector<16x512xbf16>, vector<512x784xbf16>, vector<16x784xf32> -> vector<16x784xf32>
    %c0_15 = arith.constant 0 : index
    %c0_16 = arith.constant 0 : index
    %20 = vector.load %arg7[%c0_15, %c0_16] : memref<1x784xf32, #tpu.memory_space<vmem>>, vector<1x784xf32>
    %21 = vector.broadcast %20 : vector<1x784xf32> to vector<16x784xf32>
    %22 = arith.addf %19, %21 : vector<16x784xf32>
    %c0_17 = arith.constant 0 : index
    %c0_18 = arith.constant 0 : index
    %23 = vector.load %arg8[%c0_17, %c0_18] : memref<16x784xf32, #tpu.memory_space<vmem>>, vector<16x784xf32>
    tpu.vector_store %arg8[%c0_17, %c0_18], %22 {strides = array<i32>} : memref<16x784xf32, #tpu.memory_space<vmem>>, vector<16x784xf32>,
    return
  }
  func.func @transform_0(%arg0: i32) -> (i32, i32) {
    %c0_i32 = arith.constant 0 : i32
    %c0_i32_0 = arith.constant 0 : i32
    return %arg0, %c0_i32 : i32, i32
  }
  func.func @transform_1(%arg0: i32) -> (i32, i32) {
    %c0_i32 = arith.constant 0 : i32
    %c0_i32_0 = arith.constant 0 : i32
    %c0_i32_1 = arith.constant 0 : i32
    return %c0_i32, %c0_i32_0 : i32, i32
  }
  func.func @transform_2(%arg0: i32) -> (i32, i32) {
    %c0_i32 = arith.constant 0 : i32
    %c0_i32_0 = arith.constant 0 : i32
    %c0_i32_1 = arith.constant 0 : i32
    return %c0_i32, %c0_i32_0 : i32, i32
  }
  func.func @transform_3(%arg0: i32) -> (i32, i32) {
    %c0_i32 = arith.constant 0 : i32
    %c0_i32_0 = arith.constant 0 : i32
    %c0_i32_1 = arith.constant 0 : i32
    return %c0_i32, %c0_i32_0 : i32, i32
  }
  func.func @transform_4(%arg0: i32) -> (i32, i32) {
    %c0_i32 = arith.constant 0 : i32
    %c0_i32_0 = arith.constant 0 : i32
    %c0_i32_1 = arith.constant 0 : i32
    return %c0_i32, %c0_i32_0 : i32, i32
  }
  func.func @transform_5(%arg0: i32) -> (i32, i32) {
    %c0_i32 = arith.constant 0 : i32
    %c0_i32_0 = arith.constant 0 : i32
    %c0_i32_1 = arith.constant 0 : i32
    return %c0_i32, %c0_i32_0 : i32, i32
  }
  func.func @transform_6(%arg0: i32) -> (i32, i32) {
    %c0_i32 = arith.constant 0 : i32
    %c0_i32_0 = arith.constant 0 : i32
    %c0_i32_1 = arith.constant 0 : i32
    return %c0_i32, %c0_i32_0 : i32, i32
  }
  func.func @transform_7(%arg0: i32) -> (i32, i32) {
    %c0_i32 = arith.constant 0 : i32
    %c0_i32_0 = arith.constant 0 : i32
    return %arg0, %c0_i32 : i32, i32
  }
}

</mosaic_0001>

<llo_original>
// kernel: decoder_forward.1
$region0: #{decoder_forward.1}
  #allocation0 [shape = 'u32[]', space=smem, size = 0x4, offset = 0x4, fixed_abs, tag = 'smem constant byte address 0x4 - core index']
  #allocation1 [shape = 'u32[144,128]{1,0:T(1,128)}', space=vmem, size = 0x12000, scoped, tag = 'internal scratch']
  %s0 = inlined_call_operand.vmem [shape: f32[16,100], index: 0, kind: input, shape index: {}]
  %s1 = inlined_call_operand.vmem [shape: bf16[100,256], index: 1, kind: input, shape index: {}]
  %s2 = inlined_call_operand.vmem [shape: f32[1,256], index: 2, kind: input, shape index: {}]
  %s3 = inlined_call_operand.vmem [shape: bf16[256,512], index: 3, kind: input, shape index: {}]
  %s4 = inlined_call_operand.vmem [shape: f32[1,512], index: 4, kind: input, shape index: {}]
  %s5 = inlined_call_operand.vmem [shape: bf16[512,784], index: 5, kind: input, shape index: {}]
  %s6 = inlined_call_operand.vmem [shape: f32[1,784], index: 6, kind: input, shape index: {}]
  %s7 = inlined_call_operand.vmem [shape: f32[16,784], index: 7, kind: output, shape index: {}]
  %s8 = sld [smem:[#allocation0]]
  $region38: #{decoder_forward.1} parent=0
    _
  %s10 = ssub.s32 1, %s8
  %s11 = scalar_select 0, %s10, %s8
  // Predicated region
  $region2: #{decoder_forward.1} parent=0 // pred_check
    _
  $region3: #{decoder_forward.1} parent=0 // pred_check_branch
    %13 = sbr.rel (0) target = $region5
  $region4: #{decoder_forward.1} parent=0 // pred_region
    _
  $region5: #{decoder_forward.1} parent=0 // pred_fallthru
    _
  // Predicated region
  $region6: #{decoder_forward.1} parent=0 // pred_check
    _
  $region7: #{decoder_forward.1} parent=0 // pred_check_branch
    %15 = sbr.rel (0) target = $region9
  $region8: #{decoder_forward.1} parent=0 // pred_region
    _
  $region9: #{decoder_forward.1} parent=0 // pred_fallthru
    _
  // Predicated region
  $region10: #{decoder_forward.1} parent=0 // pred_check
    _
  $region11: #{decoder_forward.1} parent=0 // pred_check_branch
    %17 = sbr.rel (0) target = $region13
  $region12: #{decoder_forward.1} parent=0 // pred_region
    _
  $region13: #{decoder_forward.1} parent=0 // pred_fallthru
    _
  // Predicated region
  $region14: #{decoder_forward.1} parent=0 // pred_check
    _
  $region15: #{decoder_forward.1} parent=0 // pred_check_branch
    %19 = sbr.rel (0) target = $region17
  $region16: #{decoder_forward.1} parent=0 // pred_region
    _
  $region17: #{decoder_forward.1} parent=0 // pred_fallthru
    _
  // Predicated region
  $region18: #{decoder_forward.1} parent=0 // pred_check
    _
  $region19: #{decoder_forward.1} parent=0 // pred_check_branch
    %21 = sbr.rel (0) target = $region21
  $region20: #{decoder_forward.1} parent=0 // pred_region
    _
  $region21: #{decoder_forward.1} parent=0 // pred_fallthru
    _
  // Predicated region
  $region22: #{decoder_forward.1} parent=0 // pred_check
    _
  $region23: #{decoder_forward.1} parent=0 // pred_check_branch
    %23 = sbr.rel (0) target = $region25
  $region24: #{decoder_forward.1} parent=0 // pred_region
    _
  $region25: #{decoder_forward.1} parent=0 // pred_fallthru
    _
  // Predicated region
  $region26: #{decoder_forward.1} parent=0 // pred_check
    _
  $region27: #{decoder_forward.1} parent=0 // pred_check_branch
    %25 = sbr.rel (0) target = $region29
  $region28: #{decoder_forward.1} parent=0 // pred_region
    _
  $region29: #{decoder_forward.1} parent=0 // pred_fallthru
    _
  %v27 = vld [vmem:[%s0] sm:$0xff]
  %v28 = vld [vmem:[%s0 + $0x8] sm:$0xff]
  %v29 = vpack.c.bf16 %v28, %v27
  %v30 = vld [vmem:[%s1] sm:$0xff]
  %v31 = vld [vmem:[%s1 + $0x8] sm:$0xff]
  %v32 = vld [vmem:[%s1 + $0x10] sm:$0xff]
  %v33 = vld [vmem:[%s1 + $0x18] sm:$0xff]
  %v34 = vld [vmem:[%s1 + $0x20] sm:$0xff]
  %v35 = vld [vmem:[%s1 + $0x28] sm:$0xff]
  %v36 = vld [vmem:[%s1 + $0x30] sm:$0xff]
  %v37 = vld [vmem:[%s1 + $0x38] sm:$0xff]
  %v38 = vld [vmem:[%s1 + $0x40] sm:$0xff]
  %v39 = vld [vmem:[%s1 + $0x48] sm:$0xff]
  %v40 = vld [vmem:[%s1 + $0x50] sm:$0xff]
  %v41 = vld [vmem:[%s1 + $0x58] sm:$0xff]
  %v42 = vld [vmem:[%s1 + $0x60] sm:$0x33]
  %v43 = vld [vmem:[%s2] sm:$0x3]
  %v45 = vlaneseq
  %v46 = vshrl.u32 %v45, 7
  %v47 = vsub.s32 0, %v46
  %v48 = vrot.slane %v43, %v47
  %v49 = vlaneseq
  %v50 = vshrl.u32 %v49, 7
  %v51 = vsub.s32 1, %v50
  %v52 = vrot.slane %v43, %v51
  %v68 = vunpack.c.l.b16 %v30
  %v69 = vunpack.c.h.b16 %v30
  %v70 = vunpack.c.l.b16 %v31
  %v71 = vunpack.c.h.b16 %v31
  %v72 = vunpack.c.l.b16 %v32
  %v73 = vunpack.c.h.b16 %v32
  %v74 = vunpack.c.l.b16 %v33
  %v75 = vunpack.c.h.b16 %v33
  %v76 = vunpack.c.l.b16 %v34
  %v77 = vunpack.c.h.b16 %v34
  %v78 = vunpack.c.l.b16 %v35
  %v79 = vunpack.c.h.b16 %v35
  %v80 = vunpack.c.l.b16 %v36
  %v81 = vunpack.c.h.b16 %v36
  %v82 = vunpack.c.l.b16 %v37
  %v83 = vunpack.c.h.b16 %v37
  %v84 = vunpack.c.l.b16 %v38
  %v85 = vunpack.c.h.b16 %v38
  %v86 = vunpack.c.l.b16 %v39
  %v87 = vunpack.c.h.b16 %v39
  %v88 = vunpack.c.l.b16 %v40
  %v89 = vunpack.c.h.b16 %v40
  %v90 = vunpack.c.l.b16 %v41
  %v91 = vunpack.c.h.b16 %v41
  %v92 = vunpack.c.l.b16 %v42
  %v93 = vunpack.c.h.b16 %v42
  %v94 = vpack.c.b16 %v70, %v68
  %v95 = vpack.c.b16 %v71, %v69
  %v96 = vpack.c.b16 %v74, %v72
  %v97 = vpack.c.b16 %v75, %v73
  %v98 = vpack.c.b16 %v78, %v76
  %v99 = vpack.c.b16 %v79, %v77
  %v100 = vpack.c.b16 %v82, %v80
  %v101 = vpack.c.b16 %v83, %v81
  %v102 = vpack.c.b16 %v86, %v84
  %v103 = vpack.c.b16 %v87, %v85
  %v104 = vpack.c.b16 %v90, %v88
  %v105 = vpack.c.b16 %v91, %v89
  %v106 = vpack.c.b16 %v92, %v92
  %v107 = vpack.c.b16 %v93, %v93
  %vm120 = vcmask 818176
  %v122 = vsel %vm120, %v29, 0
  %vm124 = vcmask 1041408
  %v126 = vsel %vm124, %v106, 0
  %v129 = vsel %vm124, %v107, 0
  %131 = vmatprep.subr.bf16.mxu0 0
  %132 = vmatpush1.bf16.msra.mxu0 0
  %133 = vmatprep.subr.bf16.mxu0 %v129
  %134 = vmatpush1.bf16.msra.mxu0 %v126
  %135 = vmatprep.subr.bf16.mxu0 %v105
  %136 = vmatpush1.bf16.msra.mxu0 %v104
  %137 = vmatprep.subr.bf16.mxu0 %v103
  %138 = vmatpush1.bf16.msra.mxu0 %v102
  %139 = vmatprep.subr.bf16.mxu0 %v101
  %140 = vmatpush1.bf16.msra.mxu0 %v100
  %141 = vmatprep.subr.bf16.mxu0 %v99
  %142 = vmatpush1.bf16.msra.mxu0 %v98
  %143 = vmatprep.subr.bf16.mxu0 %v97
  %144 = vmatpush1.bf16.msra.mxu0 %v96
  %145 = vmatprep.subr.bf16.mxu0 %v95
  %146 = vmatpush1.bf16.msra.mxu0 %v94
  %147 = vmatprep.subr.bf16.mxu0 0
  %148 = vmatpush2.bf16.msra.mxu0 0
  %149 = vmatprep.subr.bf16.mxu0 0
  %150 = vmatpush2.bf16.msra.mxu0 0
  %151 = vmatprep.subr.bf16.mxu0 0
  %152 = vmatpush2.bf16.msra.mxu0 0
  %153 = vmatprep.subr.bf16.mxu0 0
  %154 = vmatpush2.bf16.msra.mxu0 0
  %155 = vmatprep.subr.bf16.mxu0 0
  %156 = vmatpush2.bf16.msra.mxu0 0
  %157 = vmatprep.subr.bf16.mxu0 0
  %158 = vmatpush2.bf16.msra.mxu0 0
  %159 = vmatprep.subr.bf16.mxu0 0
  %160 = vmatpush2.bf16.msra.mxu0 0
  %161 = vmatprep.subr.bf16.mxu0 0
  %162 = vmatpush2.bf16.msra.mxu0 0
  %163 = vmatprep.mubr.bf16.mxu0 0
  %164 = vmatmul.mubr.bf16.gmra.mxu0 %v122
  %v165 = vpop.f32.mrf.mxu0
  %v166 = vadd.f32 %v48, %v165
  %v167 = vpop.f32.mrf.mxu0
  %v168 = vadd.f32 %v52, %v167
  %v169 = vpop.f32.mrf.mxu0
  %v170 = vadd.f32 %v48, %v169
  %v171 = vpop.f32.mrf.mxu0
  %v172 = vadd.f32 %v52, %v171
  %173 = vdwg.mxu0
  %v174 = vmax.f32 %v166, 0.0
  %v175 = vmax.f32 %v168, 0.0
  %v176 = vmax.f32 %v170, 0.0
  %v177 = vmax.f32 %v172, 0.0
  %v178 = vpack.c.bf16 %v176, %v174
  %v179 = vpack.c.bf16 %v177, %v175
  %v180 = vld [vmem:[%s3] sm:$0xff]
  %v181 = vld [vmem:[%s3 + $0x8] sm:$0xff]
  %v182 = vld [vmem:[%s3 + $0x10] sm:$0xff]
  %v183 = vld [vmem:[%s3 + $0x18] sm:$0xff]
  %v184 = vld [vmem:[%s3 + $0x20] sm:$0xff]
  %v185 = vld [vmem:[%s3 + $0x28] sm:$0xff]
  %v186 = vld [vmem:[%s3 + $0x30] sm:$0xff]
  %v187 = vld [vmem:[%s3 + $0x38] sm:$0xff]
  %v188 = vld [vmem:[%s3 + $0x40] sm:$0xff]
  %v189 = vld [vmem:[%s3 + $0x48] sm:$0xff]
  %v190 = vld [vmem:[%s3 + $0x50] sm:$0xff]
  %v191 = vld [vmem:[%s3 + $0x58] sm:$0xff]
  %v192 = vld [vmem:[%s3 + $0x60] sm:$0xff]
  %v193 = vld [vmem:[%s3 + $0x68] sm:$0xff]
  %v194 = vld [vmem:[%s3 + $0x70] sm:$0xff]
  %v195 = vld [vmem:[%s3 + $0x78] sm:$0xff]
  %v196 = vld [vmem:[%s3 + $0x80] sm:$0xff]
  %v197 = vld [vmem:[%s3 + $0x88] sm:$0xff]
  %v198 = vld [vmem:[%s3 + $0x90] sm:$0xff]
  %v199 = vld [vmem:[%s3 + $0x98] sm:$0xff]
  %v200 = vld [vmem:[%s3 + $0xa0] sm:$0xff]
  %v201 = vld [vmem:[%s3 + $0xa8] sm:$0xff]
  %v202 = vld [vmem:[%s3 + $0xb0] sm:$0xff]
  %v203 = vld [vmem:[%s3 + $0xb8] sm:$0xff]
  %v204 = vld [vmem:[%s3 + $0xc0] sm:$0xff]
  %v205 = vld [vmem:[%s3 + $0xc8] sm:$0xff]
  %v206 = vld [vmem:[%s3 + $0xd0] sm:$0xff]
  %v207 = vld [vmem:[%s3 + $0xd8] sm:$0xff]
  %v208 = vld [vmem:[%s3 + $0xe0] sm:$0xff]
  %v209 = vld [vmem:[%s3 + $0xe8] sm:$0xff]
  %v210 = vld [vmem:[%s3 + $0xf0] sm:$0xff]
  %v211 = vld [vmem:[%s3 + $0xf8] sm:$0xff]
  %v212 = vld [vmem:[%s3 + $0x100] sm:$0xff]
  %v213 = vld [vmem:[%s3 + $0x108] sm:$0xff]
  %v214 = vld [vmem:[%s3 + $0x110] sm:$0xff]
  %v215 = vld [vmem:[%s3 + $0x118] sm:$0xff]
  %v216 = vld [vmem:[%s3 + $0x120] sm:$0xff]
  %v217 = vld [vmem:[%s3 + $0x128] sm:$0xff]
  %v218 = vld [vmem:[%s3 + $0x130] sm:$0xff]
  %v219 = vld [vmem:[%s3 + $0x138] sm:$0xff]
  %v220 = vld [vmem:[%s3 + $0x140] sm:$0xff]
  %v221 = vld [vmem:[%s3 + $0x148] sm:$0xff]
  %v222 = vld [vmem:[%s3 + $0x150] sm:$0xff]
  %v223 = vld [vmem:[%s3 + $0x158] sm:$0xff]
  %v224 = vld [vmem:[%s3 + $0x160] sm:$0xff]
  %v225 = vld [vmem:[%s3 + $0x168] sm:$0xff]
  %v226 = vld [vmem:[%s3 + $0x170] sm:$0xff]
  %v227 = vld [vmem:[%s3 + $0x178] sm:$0xff]
  %v228 = vld [vmem:[%s3 + $0x180] sm:$0xff]
  %v229 = vld [vmem:[%s3 + $0x188] sm:$0xff]
  %v230 = vld [vmem:[%s3 + $0x190] sm:$0xff]
  %v231 = vld [vmem:[%s3 + $0x198] sm:$0xff]
  %v232 = vld [vmem:[%s3 + $0x1a0] sm:$0xff]
  %v233 = vld [vmem:[%s3 + $0x1a8] sm:$0xff]
  %v234 = vld [vmem:[%s3 + $0x1b0] sm:$0xff]
  %v235 = vld [vmem:[%s3 + $0x1b8] sm:$0xff]
  %v236 = vld [vmem:[%s3 + $0x1c0] sm:$0xff]
  %v237 = vld [vmem:[%s3 + $0x1c8] sm:$0xff]
  %v238 = vld [vmem:[%s3 + $0x1d0] sm:$0xff]
  %v239 = vld [vmem:[%s3 + $0x1d8] sm:$0xff]
  %v240 = vld [vmem:[%s3 + $0x1e0] sm:$0xff]
  %v241 = vld [vmem:[%s3 + $0x1e8] sm:$0xff]
  %v242 = vld [vmem:[%s3 + $0x1f0] sm:$0xff]
  %v243 = vld [vmem:[%s3 + $0x1f8] sm:$0xff]
  %v244 = vld [vmem:[%s4] sm:$0xf]
  %v246 = vlaneseq
  %v247 = vshrl.u32 %v246, 7
  %v248 = vsub.s32 0, %v247
  %v249 = vrot.slane %v244, %v248
  %v250 = vlaneseq
  %v251 = vshrl.u32 %v250, 7
  %v252 = vsub.s32 1, %v251
  %v253 = vrot.slane %v244, %v252
  %v254 = vlaneseq
  %v255 = vshrl.u32 %v254, 7
  %v256 = vsub.s32 2, %v255
  %v257 = vrot.slane %v244, %v256
  %v258 = vlaneseq
  %v259 = vshrl.u32 %v258, 7
  %v260 = vsub.s32 3, %v259
  %v261 = vrot.slane %v244, %v260
  %v330 = vunpack.c.l.b16 %v180
  %v331 = vunpack.c.h.b16 %v180
  %v332 = vunpack.c.l.b16 %v181
  %v333 = vunpack.c.h.b16 %v181
  %v334 = vunpack.c.l.b16 %v182
  %v335 = vunpack.c.h.b16 %v182
  %v336 = vunpack.c.l.b16 %v183
  %v337 = vunpack.c.h.b16 %v183
  %v338 = vunpack.c.l.b16 %v184
  %v339 = vunpack.c.h.b16 %v184
  %v340 = vunpack.c.l.b16 %v185
  %v341 = vunpack.c.h.b16 %v185
  %v342 = vunpack.c.l.b16 %v186
  %v343 = vunpack.c.h.b16 %v186
  %v344 = vunpack.c.l.b16 %v187
  %v345 = vunpack.c.h.b16 %v187
  %v346 = vunpack.c.l.b16 %v188
  %v347 = vunpack.c.h.b16 %v188
  %v348 = vunpack.c.l.b16 %v189
  %v349 = vunpack.c.h.b16 %v189
  %v350 = vunpack.c.l.b16 %v190
  %v351 = vunpack.c.h.b16 %v190
  %v352 = vunpack.c.l.b16 %v191
  %v353 = vunpack.c.h.b16 %v191
  %v354 = vunpack.c.l.b16 %v192
  %v355 = vunpack.c.h.b16 %v192
  %v356 = vunpack.c.l.b16 %v193
  %v357 = vunpack.c.h.b16 %v193
  %v358 = vunpack.c.l.b16 %v194
  %v359 = vunpack.c.h.b16 %v194
  %v360 = vunpack.c.l.b16 %v195
  %v361 = vunpack.c.h.b16 %v195
  %v362 = vunpack.c.l.b16 %v196
  %v363 = vunpack.c.h.b16 %v196
  %v364 = vunpack.c.l.b16 %v197
  %v365 = vunpack.c.h.b16 %v197
  %v366 = vunpack.c.l.b16 %v198
  %v367 = vunpack.c.h.b16 %v198
  %v368 = vunpack.c.l.b16 %v199
  %v369 = vunpack.c.h.b16 %v199
  %v370 = vunpack.c.l.b16 %v200
  %v371 = vunpack.c.h.b16 %v200
  %v372 = vunpack.c.l.b16 %v201
  %v373 = vunpack.c.h.b16 %v201
  %v374 = vunpack.c.l.b16 %v202
  %v375 = vunpack.c.h.b16 %v202
  %v376 = vunpack.c.l.b16 %v203
  %v377 = vunpack.c.h.b16 %v203
  %v378 = vunpack.c.l.b16 %v204
  %v379 = vunpack.c.h.b16 %v204
  %v380 = vunpack.c.l.b16 %v205
  %v381 = vunpack.c.h.b16 %v205
  %v382 = vunpack.c.l.b16 %v206
  %v383 = vunpack.c.h.b16 %v206
  %v384 = vunpack.c.l.b16 %v207
  %v385 = vunpack.c.h.b16 %v207
  %v386 = vunpack.c.l.b16 %v208
  %v387 = vunpack.c.h.b16 %v208
  %v388 = vunpack.c.l.b16 %v209
  %v389 = vunpack.c.h.b16 %v209
  %v390 = vunpack.c.l.b16 %v210
  %v391 = vunpack.c.h.b16 %v210
  %v392 = vunpack.c.l.b16 %v211
  %v393 = vunpack.c.h.b16 %v211
  %v394 = vunpack.c.l.b16 %v212
  %v395 = vunpack.c.h.b16 %v212
  %v396 = vunpack.c.l.b16 %v213
  %v397 = vunpack.c.h.b16 %v213
  %v398 = vunpack.c.l.b16 %v214
  %v399 = vunpack.c.h.b16 %v214
  %v400 = vunpack.c.l.b16 %v215
  %v401 = vunpack.c.h.b16 %v215
  %v402 = vunpack.c.l.b16 %v216
  %v403 = vunpack.c.h.b16 %v216
  %v404 = vunpack.c.l.b16 %v217
  %v405 = vunpack.c.h.b16 %v217
  %v406 = vunpack.c.l.b16 %v218
  %v407 = vunpack.c.h.b16 %v218
  %v408 = vunpack.c.l.b16 %v219
  %v409 = vunpack.c.h.b16 %v219
  %v410 = vunpack.c.l.b16 %v220
  %v411 = vunpack.c.h.b16 %v220
  %v412 = vunpack.c.l.b16 %v221
  %v413 = vunpack.c.h.b16 %v221
  %v414 = vunpack.c.l.b16 %v222
  %v415 = vunpack.c.h.b16 %v222
  %v416 = vunpack.c.l.b16 %v223
  %v417 = vunpack.c.h.b16 %v223
  %v418 = vunpack.c.l.b16 %v224
  %v419 = vunpack.c.h.b16 %v224
  %v420 = vunpack.c.l.b16 %v225
  %v421 = vunpack.c.h.b16 %v225
  %v422 = vunpack.c.l.b16 %v226
  %v423 = vunpack.c.h.b16 %v226
  %v424 = vunpack.c.l.b16 %v227
  %v425 = vunpack.c.h.b16 %v227
  %v426 = vunpack.c.l.b16 %v228
  %v427 = vunpack.c.h.b16 %v228
  %v428 = vunpack.c.l.b16 %v229
  %v429 = vunpack.c.h.b16 %v229
  %v430 = vunpack.c.l.b16 %v230
  %v431 = vunpack.c.h.b16 %v230
  %v432 = vunpack.c.l.b16 %v231
  %v433 = vunpack.c.h.b16 %v231
  %v434 = vunpack.c.l.b16 %v232
  %v435 = vunpack.c.h.b16 %v232
  %v436 = vunpack.c.l.b16 %v233
  %v437 = vunpack.c.h.b16 %v233
  %v438 = vunpack.c.l.b16 %v234
  %v439 = vunpack.c.h.b16 %v234
  %v440 = vunpack.c.l.b16 %v235
  %v441 = vunpack.c.h.b16 %v235
  %v442 = vunpack.c.l.b16 %v236
  %v443 = vunpack.c.h.b16 %v236
  %v444 = vunpack.c.l.b16 %v237
  %v445 = vunpack.c.h.b16 %v237
  %v446 = vunpack.c.l.b16 %v238
  %v447 = vunpack.c.h.b16 %v238
  %v448 = vunpack.c.l.b16 %v239
  %v449 = vunpack.c.h.b16 %v239
  %v450 = vunpack.c.l.b16 %v240
  %v451 = vunpack.c.h.b16 %v240
  %v452 = vunpack.c.l.b16 %v241
  %v453 = vunpack.c.h.b16 %v241
  %v454 = vunpack.c.l.b16 %v242
  %v455 = vunpack.c.h.b16 %v242
  %v456 = vunpack.c.l.b16 %v243
  %v457 = vunpack.c.h.b16 %v243
  %v458 = vpack.c.b16 %v334, %v330
  %v459 = vpack.c.b16 %v335, %v331
  %v460 = vpack.c.b16 %v336, %v332
  %v461 = vpack.c.b16 %v337, %v333
  %v462 = vpack.c.b16 %v342, %v338
  %v463 = vpack.c.b16 %v343, %v339
  %v464 = vpack.c.b16 %v344, %v340
  %v465 = vpack.c.b16 %v345, %v341
  %v466 = vpack.c.b16 %v350, %v346
  %v467 = vpack.c.b16 %v351, %v347
  %v468 = vpack.c.b16 %v352, %v348
  %v469 = vpack.c.b16 %v353, %v349
  %v470 = vpack.c.b16 %v358, %v354
  %v471 = vpack.c.b16 %v359, %v355
  %v472 = vpack.c.b16 %v360, %v356
  %v473 = vpack.c.b16 %v361, %v357
  %v474 = vpack.c.b16 %v366, %v362
  %v475 = vpack.c.b16 %v367, %v363
  %v476 = vpack.c.b16 %v368, %v364
  %v477 = vpack.c.b16 %v369, %v365
  %v478 = vpack.c.b16 %v374, %v370
  %v479 = vpack.c.b16 %v375, %v371
  %v480 = vpack.c.b16 %v376, %v372
  %v481 = vpack.c.b16 %v377, %v373
  %v482 = vpack.c.b16 %v382, %v378
  %v483 = vpack.c.b16 %v383, %v379
  %v484 = vpack.c.b16 %v384, %v380
  %v485 = vpack.c.b16 %v385, %v381
  %v486 = vpack.c.b16 %v390, %v386
  %v487 = vpack.c.b16 %v391, %v387
  %v488 = vpack.c.b16 %v392, %v388
  %v489 = vpack.c.b16 %v393, %v389
  %v490 = vpack.c.b16 %v398, %v394
  %v491 = vpack.c.b16 %v399, %v395
  %v492 = vpack.c.b16 %v400, %v396
  %v493 = vpack.c.b16 %v401, %v397
  %v494 = vpack.c.b16 %v406, %v402
  %v495 = vpack.c.b16 %v407, %v403
  %v496 = vpack.c.b16 %v408, %v404
  %v497 = vpack.c.b16 %v409, %v405
  %v498 = vpack.c.b16 %v414, %v410
  %v499 = vpack.c.b16 %v415, %v411
  %v500 = vpack.c.b16 %v416, %v412
  %v501 = vpack.c.b16 %v417, %v413
  %v502 = vpack.c.b16 %v422, %v418
  %v503 = vpack.c.b16 %v423, %v419
  %v504 = vpack.c.b16 %v424, %v420
  %v505 = vpack.c.b16 %v425, %v421
  %v506 = vpack.c.b16 %v430, %v426
  %v507 = vpack.c.b16 %v431, %v427
  %v508 = vpack.c.b16 %v432, %v428
  %v509 = vpack.c.b16 %v433, %v429
  %v510 = vpack.c.b16 %v438, %v434
  %v511 = vpack.c.b16 %v439, %v435
  %v512 = vpack.c.b16 %v440, %v436
  %v513 = vpack.c.b16 %v441, %v437
  %v514 = vpack.c.b16 %v446, %v442
  %v515 = vpack.c.b16 %v447, %v443
  %v516 = vpack.c.b16 %v448, %v444
  %v517 = vpack.c.b16 %v449, %v445
  %v518 = vpack.c.b16 %v454, %v450
  %v519 = vpack.c.b16 %v455, %v451
  %v520 = vpack.c.b16 %v456, %v452
  %v521 = vpack.c.b16 %v457, %v453
  %586 = vmatprep.subr.bf16.mxu0 %v487
  %587 = vmatpush1.bf16.msra.mxu0 %v486
  %588 = vmatprep.subr.bf16.mxu0 %v483
  %589 = vmatpush1.bf16.msra.mxu0 %v482
  %590 = vmatprep.subr.bf16.mxu0 %v479
  %591 = vmatpush1.bf16.msra.mxu0 %v478
  %592 = vmatprep.subr.bf16.mxu0 %v475
  %593 = vmatpush1.bf16.msra.mxu0 %v474
  %594 = vmatprep.subr.bf16.mxu0 %v471
  %595 = vmatpush1.bf16.msra.mxu0 %v470
  %596 = vmatprep.subr.bf16.mxu0 %v467
  %597 = vmatpush1.bf16.msra.mxu0 %v466
  %598 = vmatprep.subr.bf16.mxu0 %v463
  %599 = vmatpush1.bf16.msra.mxu0 %v462
  %600 = vmatprep.subr.bf16.mxu0 %v459
  %601 = vmatpush1.bf16.msra.mxu0 %v458
  %602 = vmatprep.subr.bf16.mxu0 %v519
  %603 = vmatpush2.bf16.msra.mxu0 %v518
  %604 = vmatprep.subr.bf16.mxu0 %v515
  %605 = vmatpush2.bf16.msra.mxu0 %v514
  %606 = vmatprep.subr.bf16.mxu0 %v511
  %607 = vmatpush2.bf16.msra.mxu0 %v510
  %608 = vmatprep.subr.bf16.mxu0 %v507
  %609 = vmatpush2.bf16.msra.mxu0 %v506
  %610 = vmatprep.subr.bf16.mxu0 %v503
  %611 = vmatpush2.bf16.msra.mxu0 %v502
  %612 = vmatprep.subr.bf16.mxu0 %v499
  %613 = vmatpush2.bf16.msra.mxu0 %v498
  %614 = vmatprep.subr.bf16.mxu0 %v495
  %615 = vmatpush2.bf16.msra.mxu0 %v494
  %616 = vmatprep.subr.bf16.mxu0 %v491
  %617 = vmatpush2.bf16.msra.mxu0 %v490
  %618 = vmatprep.mubr.bf16.mxu0 %v179
  %619 = vmatmul.mubr.bf16.gmra.mxu0 %v178
  %v620 = vpop.f32.mrf.mxu0
  %v621 = vadd.f32 %v249, %v620
  %v622 = vpop.f32.mrf.mxu0
  %v623 = vadd.f32 %v253, %v622
  %v624 = vpop.f32.mrf.mxu0
  %v625 = vadd.f32 %v249, %v624
  %v626 = vpop.f32.mrf.mxu0
  %v627 = vadd.f32 %v253, %v626
  %628 = vdwg.mxu0
  %629 = vmatprep.subr.bf16.mxu0 %v489
  %630 = vmatpush1.bf16.msra.mxu0 %v488
  %631 = vmatprep.subr.bf16.mxu0 %v485
  %632 = vmatpush1.bf16.msra.mxu0 %v484
  %633 = vmatprep.subr.bf16.mxu0 %v481
  %634 = vmatpush1.bf16.msra.mxu0 %v480
  %635 = vmatprep.subr.bf16.mxu0 %v477
  %636 = vmatpush1.bf16.msra.mxu0 %v476
  %637 = vmatprep.subr.bf16.mxu0 %v473
  %638 = vmatpush1.bf16.msra.mxu0 %v472
  %639 = vmatprep.subr.bf16.mxu0 %v469
  %640 = vmatpush1.bf16.msra.mxu0 %v468
  %641 = vmatprep.subr.bf16.mxu0 %v465
  %642 = vmatpush1.bf16.msra.mxu0 %v464
  %643 = vmatprep.subr.bf16.mxu0 %v461
  %644 = vmatpush1.bf16.msra.mxu0 %v460
  %645 = vmatprep.subr.bf16.mxu0 %v521
  %646 = vmatpush2.bf16.msra.mxu0 %v520
  %647 = vmatprep.subr.bf16.mxu0 %v517
  %648 = vmatpush2.bf16.msra.mxu0 %v516
  %649 = vmatprep.subr.bf16.mxu0 %v513
  %650 = vmatpush2.bf16.msra.mxu0 %v512
  %651 = vmatprep.subr.bf16.mxu0 %v509
  %652 = vmatpush2.bf16.msra.mxu0 %v508
  %653 = vmatprep.subr.bf16.mxu0 %v505
  %654 = vmatpush2.bf16.msra.mxu0 %v504
  %655 = vmatprep.subr.bf16.mxu0 %v501
  %656 = vmatpush2.bf16.msra.mxu0 %v500
  %657 = vmatprep.subr.bf16.mxu0 %v497
  %658 = vmatpush2.bf16.msra.mxu0 %v496
  %659 = vmatprep.subr.bf16.mxu0 %v493
  %660 = vmatpush2.bf16.msra.mxu0 %v492
  %661 = vmatprep.mubr.bf16.mxu0 %v179
  %662 = vmatmul.mubr.bf16.gmra.mxu0 %v178
  %v663 = vpop.f32.mrf.mxu0
  %v664 = vadd.f32 %v257, %v663
  %v665 = vpop.f32.mrf.mxu0
  %v666 = vadd.f32 %v261, %v665
  %v667 = vpop.f32.mrf.mxu0
  %v668 = vadd.f32 %v257, %v667
  %v669 = vpop.f32.mrf.mxu0
  %v670 = vadd.f32 %v261, %v669
  %671 = vdwg.mxu0
  %v672 = vmax.f32 %v621, 0.0
  %v673 = vmax.f32 %v623, 0.0
  %v674 = vmax.f32 %v664, 0.0
  %v675 = vmax.f32 %v666, 0.0
  %v676 = vmax.f32 %v625, 0.0
  %v677 = vmax.f32 %v627, 0.0
  %v678 = vmax.f32 %v668, 0.0
  %v679 = vmax.f32 %v670, 0.0
  %v680 = vpack.c.bf16 %v676, %v672
  %v681 = vpack.c.bf16 %v677, %v673
  %v682 = vpack.c.bf16 %v678, %v674
  %v683 = vpack.c.bf16 %v679, %v675
  %v684 = vld [vmem:[%s5] sm:$0xff]
  %v685 = vld [vmem:[%s5 + $0x8] sm:$0xff]
  %v686 = vld [vmem:[%s5 + $0x10] sm:$0xff]
  %v687 = vld [vmem:[%s5 + $0x18] sm:$0xf]
  %v688 = vld [vmem:[%s5 + $0x1c] sm:$0xff]
  %v689 = vld [vmem:[%s5 + $0x24] sm:$0xff]
  %v690 = vld [vmem:[%s5 + $0x2c] sm:$0xff]
  %v691 = vld [vmem:[%s5 + $0x34] sm:$0xf]
  %v692 = vld [vmem:[%s5 + $0x38] sm:$0xff]
  %v693 = vld [vmem:[%s5 + $0x40] sm:$0xff]
  %v694 = vld [vmem:[%s5 + $0x48] sm:$0xff]
  %v695 = vld [vmem:[%s5 + $0x50] sm:$0xf]
  %v696 = vld [vmem:[%s5 + $0x54] sm:$0xff]
  %v697 = vld [vmem:[%s5 + $0x5c] sm:$0xff]
  %v698 = vld [vmem:[%s5 + $0x64] sm:$0xff]
  %v699 = vld [vmem:[%s5 + $0x6c] sm:$0xf]
  %v700 = vld [vmem:[%s5 + $0x70] sm:$0xff]
  %v701 = vld [vmem:[%s5 + $0x78] sm:$0xff]
  %v702 = vld [vmem:[%s5 + $0x80] sm:$0xff]
  %v703 = vld [vmem:[%s5 + $0x88] sm:$0xf]
  %v704 = vld [vmem:[%s5 + $0x8c] sm:$0xff]
  %v705 = vld [vmem:[%s5 + $0x94] sm:$0xff]
  %v706 = vld [vmem:[%s5 + $0x9c] sm:$0xff]
  %v707 = vld [vmem:[%s5 + $0xa4] sm:$0xf]
  %v708 = vld [vmem:[%s5 + $0xa8] sm:$0xff]
  %v709 = vld [vmem:[%s5 + $0xb0] sm:$0xff]
  %v710 = vld [vmem:[%s5 + $0xb8] sm:$0xff]
  %v711 = vld [vmem:[%s5 + $0xc0] sm:$0xf]
  %v712 = vld [vmem:[%s5 + $0xc4] sm:$0xff]
  %v713 = vld [vmem:[%s5 + $0xcc] sm:$0xff]
  %v714 = vld [vmem:[%s5 + $0xd4] sm:$0xff]
  %v715 = vld [vmem:[%s5 + $0xdc] sm:$0xf]
  %v716 = vld [vmem:[%s5 + $0xe0] sm:$0xff]
  %v717 = vld [vmem:[%s5 + $0xe8] sm:$0xff]
  %v718 = vld [vmem:[%s5 + $0xf0] sm:$0xff]
  %v719 = vld [vmem:[%s5 + $0xf8] sm:$0xf]
  %v720 = vld [vmem:[%s5 + $0xfc] sm:$0xff]
  %v721 = vld [vmem:[%s5 + $0x104] sm:$0xff]
  %v722 = vld [vmem:[%s5 + $0x10c] sm:$0xff]
  %v723 = vld [vmem:[%s5 + $0x114] sm:$0xf]
  %v724 = vld [vmem:[%s5 + $0x118] sm:$0xff]
  %v725 = vld [vmem:[%s5 + $0x120] sm:$0xff]
  %v726 = vld [vmem:[%s5 + $0x128] sm:$0xff]
  %v727 = vld [vmem:[%s5 + $0x130] sm:$0xf]
  %v728 = vld [vmem:[%s5 + $0x134] sm:$0xff]
  %v729 = vld [vmem:[%s5 + $0x13c] sm:$0xff]
  %v730 = vld [vmem:[%s5 + $0x144] sm:$0xff]
  %v731 = vld [vmem:[%s5 + $0x14c] sm:$0xf]
  %v732 = vld [vmem:[%s5 + $0x150] sm:$0xff]
  %v733 = vld [vmem:[%s5 + $0x158] sm:$0xff]
  %v734 = vld [vmem:[%s5 + $0x160] sm:$0xff]
  %v735 = vld [vmem:[%s5 + $0x168] sm:$0xf]
  %v736 = vld [vmem:[%s5 + $0x16c] sm:$0xff]
  %v737 = vld [vmem:[%s5 + $0x174] sm:$0xff]
  %v738 = vld [vmem:[%s5 + $0x17c] sm:$0xff]
  %v739 = vld [vmem:[%s5 + $0x184] sm:$0xf]
  %v740 = vld [vmem:[%s5 + $0x188] sm:$0xff]
  %v741 = vld [vmem:[%s5 + $0x190] sm:$0xff]
  %v742 = vld [vmem:[%s5 + $0x198] sm:$0xff]
  %v743 = vld [vmem:[%s5 + $0x1a0] sm:$0xf]
  %v744 = vld [vmem:[%s5 + $0x1a4] sm:$0xff]
  %v745 = vld [vmem:[%s5 + $0x1ac] sm:$0xff]
  %v746 = vld [vmem:[%s5 + $0x1b4] sm:$0xff]
  %v747 = vld [vmem:[%s5 + $0x1bc] sm:$0xf]
  %v748 = vld [vmem:[%s5 + $0x1c0] sm:$0xff]
  %v749 = vld [vmem:[%s5 + $0x1c8] sm:$0xff]
  %v750 = vld [vmem:[%s5 + $0x1d0] sm:$0xff]
  %v751 = vld [vmem:[%s5 + $0x1d8] sm:$0xf]
  %v752 = vld [vmem:[%s5 + $0x1dc] sm:$0xff]
  %v753 = vld [vmem:[%s5 + $0x1e4] sm:$0xff]
  %v754 = vld [vmem:[%s5 + $0x1ec] sm:$0xff]
  %v755 = vld [vmem:[%s5 + $0x1f4] sm:$0xf]
  %v756 = vld [vmem:[%s5 + $0x1f8] sm:$0xff]
  %v757 = vld [vmem:[%s5 + $0x200] sm:$0xff]
  %v758 = vld [vmem:[%s5 + $0x208] sm:$0xff]
  %v759 = vld [vmem:[%s5 + $0x210] sm:$0xf]
  %v760 = vld [vmem:[%s5 + $0x214] sm:$0xff]
  %v761 = vld [vmem:[%s5 + $0x21c] sm:$0xff]
  %v762 = vld [vmem:[%s5 + $0x224] sm:$0xff]
  %v763 = vld [vmem:[%s5 + $0x22c] sm:$0xf]
  %v764 = vld [vmem:[%s5 + $0x230] sm:$0xff]
  %v765 = vld [vmem:[%s5 + $0x238] sm:$0xff]
  %v766 = vld [vmem:[%s5 + $0x240] sm:$0xff]
  %v767 = vld [vmem:[%s5 + $0x248] sm:$0xf]
  %v768 = vld [vmem:[%s5 + $0x24c] sm:$0xff]
  %v769 = vld [vmem:[%s5 + $0x254] sm:$0xff]
  %v770 = vld [vmem:[%s5 + $0x25c] sm:$0xff]
  %v771 = vld [vmem:[%s5 + $0x264] sm:$0xf]
  %v772 = vld [vmem:[%s5 + $0x268] sm:$0xff]
  %v773 = vld [vmem:[%s5 + $0x270] sm:$0xff]
  %v774 = vld [vmem:[%s5 + $0x278] sm:$0xff]
  %v775 = vld [vmem:[%s5 + $0x280] sm:$0xf]
  %v776 = vld [vmem:[%s5 + $0x284] sm:$0xff]
  %v777 = vld [vmem:[%s5 + $0x28c] sm:$0xff]
  %v778 = vld [vmem:[%s5 + $0x294] sm:$0xff]
  %v779 = vld [vmem:[%s5 + $0x29c] sm:$0xf]
  %v780 = vld [vmem:[%s5 + $0x2a0] sm:$0xff]
  %v781 = vld [vmem:[%s5 + $0x2a8] sm:$0xff]
  %v782 = vld [vmem:[%s5 + $0x2b0] sm:$0xff]
  %v783 = vld [vmem:[%s5 + $0x2b8] sm:$0xf]
  %v784 = vld [vmem:[%s5 + $0x2bc] sm:$0xff]
  %v785 = vld [vmem:[%s5 + $0x2c4] sm:$0xff]
  %v786 = vld [vmem:[%s5 + $0x2cc] sm:$0xff]
  %v787 = vld [vmem:[%s5 + $0x2d4] sm:$0xf]
  %v788 = vld [vmem:[%s5 + $0x2d8] sm:$0xff]
  %v789 = vld [vmem:[%s5 + $0x2e0] sm:$0xff]
  %v790 = vld [vmem:[%s5 + $0x2e8] sm:$0xff]
  %v791 = vld [vmem:[%s5 + $0x2f0] sm:$0xf]
  %v792 = vld [vmem:[%s5 + $0x2f4] sm:$0xff]
  %v793 = vld [vmem:[%s5 + $0x2fc] sm:$0xff]
  %v794 = vld [vmem:[%s5 + $0x304] sm:$0xff]
  %v795 = vld [vmem:[%s5 + $0x30c] sm:$0xf]
  %v796 = vld [vmem:[%s5 + $0x310] sm:$0xff]
  %v797 = vld [vmem:[%s5 + $0x318] sm:$0xff]
  %v798 = vld [vmem:[%s5 + $0x320] sm:$0xff]
  %v799 = vld [vmem:[%s5 + $0x328] sm:$0xf]
  %v800 = vld [vmem:[%s5 + $0x32c] sm:$0xff]
  %v801 = vld [vmem:[%s5 + $0x334] sm:$0xff]
  %v802 = vld [vmem:[%s5 + $0x33c] sm:$0xff]
  %v803 = vld [vmem:[%s5 + $0x344] sm:$0xf]
  %v804 = vld [vmem:[%s5 + $0x348] sm:$0xff]
  %v805 = vld [vmem:[%s5 + $0x350] sm:$0xff]
  %v806 = vld [vmem:[%s5 + $0x358] sm:$0xff]
  %v807 = vld [vmem:[%s5 + $0x360] sm:$0xf]
  %v808 = vld [vmem:[%s5 + $0x364] sm:$0xff]
  %v809 = vld [vmem:[%s5 + $0x36c] sm:$0xff]
  %v810 = vld [vmem:[%s5 + $0x374] sm:$0xff]
  %v811 = vld [vmem:[%s5 + $0x37c] sm:$0xf]
  %v812 = vld [vmem:[%s5 + $0x380] sm:$0xff]
  %v813 = vld [vmem:[%s5 + $0x388] sm:$0xff]
  %v814 = vld [vmem:[%s5 + $0x390] sm:$0xff]
  %v815 = vld [vmem:[%s5 + $0x398] sm:$0xf]
  %v816 = vld [vmem:[%s5 + $0x39c] sm:$0xff]
  %v817 = vld [vmem:[%s5 + $0x3a4] sm:$0xff]
  %v818 = vld [vmem:[%s5 + $0x3ac] sm:$0xff]
  %v819 = vld [vmem:[%s5 + $0x3b4] sm:$0xf]
  %v820 = vld [vmem:[%s5 + $0x3b8] sm:$0xff]
  %v821 = vld [vmem:[%s5 + $0x3c0] sm:$0xff]
  %v822 = vld [vmem:[%s5 + $0x3c8] sm:$0xff]
  %v823 = vld [vmem:[%s5 + $0x3d0] sm:$0xf]
  %v824 = vld [vmem:[%s5 + $0x3d4] sm:$0xff]
  %v825 = vld [vmem:[%s5 + $0x3dc] sm:$0xff]
  %v826 = vld [vmem:[%s5 + $0x3e4] sm:$0xff]
  %v827 = vld [vmem:[%s5 + $0x3ec] sm:$0xf]
  %v828 = vld [vmem:[%s5 + $0x3f0] sm:$0xff]
  %v829 = vld [vmem:[%s5 + $0x3f8] sm:$0xff]
  %v830 = vld [vmem:[%s5 + $0x400] sm:$0xff]
  %v831 = vld [vmem:[%s5 + $0x408] sm:$0xf]
  %v832 = vld [vmem:[%s5 + $0x40c] sm:$0xff]
  %v833 = vld [vmem:[%s5 + $0x414] sm:$0xff]
  %v834 = vld [vmem:[%s5 + $0x41c] sm:$0xff]
  %v835 = vld [vmem:[%s5 + $0x424] sm:$0xf]
  %v836 = vld [vmem:[%s5 + $0x428] sm:$0xff]
  %v837 = vld [vmem:[%s5 + $0x430] sm:$0xff]
  %v838 = vld [vmem:[%s5 + $0x438] sm:$0xff]
  %v839 = vld [vmem:[%s5 + $0x440] sm:$0xf]
  %v840 = vld [vmem:[%s5 + $0x444] sm:$0xff]
  %v841 = vld [vmem:[%s5 + $0x44c] sm:$0xff]
  %v842 = vld [vmem:[%s5 + $0x454] sm:$0xff]
  %v843 = vld [vmem:[%s5 + $0x45c] sm:$0xf]
  %v844 = vld [vmem:[%s5 + $0x460] sm:$0xff]
  %v845 = vld [vmem:[%s5 + $0x468] sm:$0xff]
  %v846 = vld [vmem:[%s5 + $0x470] sm:$0xff]
  %v847 = vld [vmem:[%s5 + $0x478] sm:$0xf]
  %v848 = vld [vmem:[%s5 + $0x47c] sm:$0xff]
  %v849 = vld [vmem:[%s5 + $0x484] sm:$0xff]
  %v850 = vld [vmem:[%s5 + $0x48c] sm:$0xff]
  %v851 = vld [vmem:[%s5 + $0x494] sm:$0xf]
  %v852 = vld [vmem:[%s5 + $0x498] sm:$0xff]
  %v853 = vld [vmem:[%s5 + $0x4a0] sm:$0xff]
  %v854 = vld [vmem:[%s5 + $0x4a8] sm:$0xff]
  %v855 = vld [vmem:[%s5 + $0x4b0] sm:$0xf]
  %v856 = vld [vmem:[%s5 + $0x4b4] sm:$0xff]
  %v857 = vld [vmem:[%s5 + $0x4bc] sm:$0xff]
  %v858 = vld [vmem:[%s5 + $0x4c4] sm:$0xff]
  %v859 = vld [vmem:[%s5 + $0x4cc] sm:$0xf]
  %v860 = vld [vmem:[%s5 + $0x4d0] sm:$0xff]
  %v861 = vld [vmem:[%s5 + $0x4d8] sm:$0xff]
  %v862 = vld [vmem:[%s5 + $0x4e0] sm:$0xff]
  %v863 = vld [vmem:[%s5 + $0x4e8] sm:$0xf]
  %v864 = vld [vmem:[%s5 + $0x4ec] sm:$0xff]
  %v865 = vld [vmem:[%s5 + $0x4f4] sm:$0xff]
  %v866 = vld [vmem:[%s5 + $0x4fc] sm:$0xff]
  %v867 = vld [vmem:[%s5 + $0x504] sm:$0xf]
  %v868 = vld [vmem:[%s5 + $0x508] sm:$0xff]
  %v869 = vld [vmem:[%s5 + $0x510] sm:$0xff]
  %v870 = vld [vmem:[%s5 + $0x518] sm:$0xff]
  %v871 = vld [vmem:[%s5 + $0x520] sm:$0xf]
  %v872 = vld [vmem:[%s5 + $0x524] sm:$0xff]
  %v873 = vld [vmem:[%s5 + $0x52c] sm:$0xff]
  %v874 = vld [vmem:[%s5 + $0x534] sm:$0xff]
  %v875 = vld [vmem:[%s5 + $0x53c] sm:$0xf]
  %v876 = vld [vmem:[%s5 + $0x540] sm:$0xff]
  %v877 = vld [vmem:[%s5 + $0x548] sm:$0xff]
  %v878 = vld [vmem:[%s5 + $0x550] sm:$0xff]
  %v879 = vld [vmem:[%s5 + $0x558] sm:$0xf]
  %v880 = vld [vmem:[%s5 + $0x55c] sm:$0xff]
  %v881 = vld [vmem:[%s5 + $0x564] sm:$0xff]
  %v882 = vld [vmem:[%s5 + $0x56c] sm:$0xff]
  %v883 = vld [vmem:[%s5 + $0x574] sm:$0xf]
  %v884 = vld [vmem:[%s5 + $0x578] sm:$0xff]
  %v885 = vld [vmem:[%s5 + $0x580] sm:$0xff]
  %v886 = vld [vmem:[%s5 + $0x588] sm:$0xff]
  %v887 = vld [vmem:[%s5 + $0x590] sm:$0xf]
  %v888 = vld [vmem:[%s5 + $0x594] sm:$0xff]
  %v889 = vld [vmem:[%s5 + $0x59c] sm:$0xff]
  %v890 = vld [vmem:[%s5 + $0x5a4] sm:$0xff]
  %v891 = vld [vmem:[%s5 + $0x5ac] sm:$0xf]
  %v892 = vld [vmem:[%s5 + $0x5b0] sm:$0xff]
  %v893 = vld [vmem:[%s5 + $0x5b8] sm:$0xff]
  %v894 = vld [vmem:[%s5 + $0x5c0] sm:$0xff]
  %v895 = vld [vmem:[%s5 + $0x5c8] sm:$0xf]
  %v896 = vld [vmem:[%s5 + $0x5cc] sm:$0xff]
  %v897 = vld [vmem:[%s5 + $0x5d4] sm:$0xff]
  %v898 = vld [vmem:[%s5 + $0x5dc] sm:$0xff]
  %v899 = vld [vmem:[%s5 + $0x5e4] sm:$0xf]
  %v900 = vld [vmem:[%s5 + $0x5e8] sm:$0xff]
  %v901 = vld [vmem:[%s5 + $0x5f0] sm:$0xff]
  %v902 = vld [vmem:[%s5 + $0x5f8] sm:$0xff]
  %v903 = vld [vmem:[%s5 + $0x600] sm:$0xf]
  %v904 = vld [vmem:[%s5 + $0x604] sm:$0xff]
  %v905 = vld [vmem:[%s5 + $0x60c] sm:$0xff]
  %v906 = vld [vmem:[%s5 + $0x614] sm:$0xff]
  %v907 = vld [vmem:[%s5 + $0x61c] sm:$0xf]
  %v908 = vld [vmem:[%s5 + $0x620] sm:$0xff]
  %v909 = vld [vmem:[%s5 + $0x628] sm:$0xff]
  %v910 = vld [vmem:[%s5 + $0x630] sm:$0xff]
  %v911 = vld [vmem:[%s5 + $0x638] sm:$0xf]
  %v912 = vld [vmem:[%s5 + $0x63c] sm:$0xff]
  %v913 = vld [vmem:[%s5 + $0x644] sm:$0xff]
  %v914 = vld [vmem:[%s5 + $0x64c] sm:$0xff]
  %v915 = vld [vmem:[%s5 + $0x654] sm:$0xf]
  %v916 = vld [vmem:[%s5 + $0x658] sm:$0xff]
  %v917 = vld [vmem:[%s5 + $0x660] sm:$0xff]
  %v918 = vld [vmem:[%s5 + $0x668] sm:$0xff]
  %v919 = vld [vmem:[%s5 + $0x670] sm:$0xf]
  %v920 = vld [vmem:[%s5 + $0x674] sm:$0xff]
  %v921 = vld [vmem:[%s5 + $0x67c] sm:$0xff]
  %v922 = vld [vmem:[%s5 + $0x684] sm:$0xff]
  %v923 = vld [vmem:[%s5 + $0x68c] sm:$0xf]
  %v924 = vld [vmem:[%s5 + $0x690] sm:$0xff]
  %v925 = vld [vmem:[%s5 + $0x698] sm:$0xff]
  %v926 = vld [vmem:[%s5 + $0x6a0] sm:$0xff]
  %v927 = vld [vmem:[%s5 + $0x6a8] sm:$0xf]
  %v928 = vld [vmem:[%s5 + $0x6ac] sm:$0xff]
  %v929 = vld [vmem:[%s5 + $0x6b4] sm:$0xff]
  %v930 = vld [vmem:[%s5 + $0x6bc] sm:$0xff]
  %v931 = vld [vmem:[%s5 + $0x6c4] sm:$0xf]
  %v932 = vld [vmem:[%s5 + $0x6c8] sm:$0xff]
  %v933 = vld [vmem:[%s5 + $0x6d0] sm:$0xff]
  %v934 = vld [vmem:[%s5 + $0x6d8] sm:$0xff]
  %v935 = vld [vmem:[%s5 + $0x6e0] sm:$0xf]
  %v936 = vld [vmem:[%s5 + $0x6e4] sm:$0xff]
  %v937 = vld [vmem:[%s5 + $0x6ec] sm:$0xff]
  %v938 = vld [vmem:[%s5 + $0x6f4] sm:$0xff]
  %v939 = vld [vmem:[%s5 + $0x6fc] sm:$0xf]
  %v940 = vld [vmem:[%s6] sm:$0x7f]
  %v942 = vlaneseq
  %v943 = vshrl.u32 %v942, 7
  %v944 = vsub.s32 0, %v943
  %v945 = vrot.slane %v940, %v944
  %v946 = vlaneseq
  %v947 = vshrl.u32 %v946, 7
  %v948 = vsub.s32 1, %v947
  %v949 = vrot.slane %v940, %v948
  %v950 = vlaneseq
  %v951 = vshrl.u32 %v950, 7
  %v952 = vsub.s32 2, %v951
  %v953 = vrot.slane %v940, %v952
  %v954 = vlaneseq
  %v955 = vshrl.u32 %v954, 7
  %v956 = vsub.s32 3, %v955
  %v957 = vrot.slane %v940, %v956
  %v958 = vlaneseq
  %v959 = vshrl.u32 %v958, 7
  %v960 = vsub.s32 4, %v959
  %v961 = vrot.slane %v940, %v960
  %v962 = vlaneseq
  %v963 = vshrl.u32 %v962, 7
  %v964 = vsub.s32 5, %v963
  %v965 = vrot.slane %v940, %v964
  %v966 = vlaneseq
  %v967 = vshrl.u32 %v966, 7
  %v968 = vsub.s32 6, %v967
  %v969 = vrot.slane %v940, %v968
  %v1233 = vunpack.c.l.b16 %v684
  %v1234 = vunpack.c.h.b16 %v684
  %v1235 = vunpack.c.l.b16 %v685
  %v1236 = vunpack.c.h.b16 %v685
  %v1237 = vunpack.c.l.b16 %v686
  %v1238 = vunpack.c.h.b16 %v686
  %v1239 = vunpack.c.l.b16 %v687
  %v1240 = vunpack.c.l.b16 %v688
  %v1241 = vunpack.c.h.b16 %v688
  %v1242 = vunpack.c.l.b16 %v689
  %v1243 = vunpack.c.h.b16 %v689
  %v1244 = vunpack.c.l.b16 %v690
  %v1245 = vunpack.c.h.b16 %v690
  %v1246 = vunpack.c.l.b16 %v691
  %v1247 = vunpack.c.l.b16 %v692
  %v1248 = vunpack.c.h.b16 %v692
  %v1249 = vunpack.c.l.b16 %v693
  %v1250 = vunpack.c.h.b16 %v693
  %v1251 = vunpack.c.l.b16 %v694
  %v1252 = vunpack.c.h.b16 %v694
  %v1253 = vunpack.c.l.b16 %v695
  %v1254 = vunpack.c.l.b16 %v696
  %v1255 = vunpack.c.h.b16 %v696
  %v1256 = vunpack.c.l.b16 %v697
  %v1257 = vunpack.c.h.b16 %v697
  %v1258 = vunpack.c.l.b16 %v698
  %v1259 = vunpack.c.h.b16 %v698
  %v1260 = vunpack.c.l.b16 %v699
  %v1261 = vunpack.c.l.b16 %v700
  %v1262 = vunpack.c.h.b16 %v700
  %v1263 = vunpack.c.l.b16 %v701
  %v1264 = vunpack.c.h.b16 %v701
  %v1265 = vunpack.c.l.b16 %v702
  %v1266 = vunpack.c.h.b16 %v702
  %v1267 = vunpack.c.l.b16 %v703
  %v1268 = vunpack.c.l.b16 %v704
  %v1269 = vunpack.c.h.b16 %v704
  %v1270 = vunpack.c.l.b16 %v705
  %v1271 = vunpack.c.h.b16 %v705
  %v1272 = vunpack.c.l.b16 %v706
  %v1273 = vunpack.c.h.b16 %v706
  %v1274 = vunpack.c.l.b16 %v707
  %v1275 = vunpack.c.l.b16 %v708
  %v1276 = vunpack.c.h.b16 %v708
  %v1277 = vunpack.c.l.b16 %v709
  %v1278 = vunpack.c.h.b16 %v709
  %v1279 = vunpack.c.l.b16 %v710
  %v1280 = vunpack.c.h.b16 %v710
  %v1281 = vunpack.c.l.b16 %v711
  %v1282 = vunpack.c.l.b16 %v712
  %v1283 = vunpack.c.h.b16 %v712
  %v1284 = vunpack.c.l.b16 %v713
  %v1285 = vunpack.c.h.b16 %v713
  %v1286 = vunpack.c.l.b16 %v714
  %v1287 = vunpack.c.h.b16 %v714
  %v1288 = vunpack.c.l.b16 %v715
  %v1289 = vunpack.c.l.b16 %v716
  %v1290 = vunpack.c.h.b16 %v716
  %v1291 = vunpack.c.l.b16 %v717
  %v1292 = vunpack.c.h.b16 %v717
  %v1293 = vunpack.c.l.b16 %v718
  %v1294 = vunpack.c.h.b16 %v718
  %v1295 = vunpack.c.l.b16 %v719
  %v1296 = vunpack.c.l.b16 %v720
  %v1297 = vunpack.c.h.b16 %v720
  %v1298 = vunpack.c.l.b16 %v721
  %v1299 = vunpack.c.h.b16 %v721
  %v1300 = vunpack.c.l.b16 %v722
  %v1301 = vunpack.c.h.b16 %v722
  %v1302 = vunpack.c.l.b16 %v723
  %v1303 = vunpack.c.l.b16 %v724
  %v1304 = vunpack.c.h.b16 %v724
  %v1305 = vunpack.c.l.b16 %v725
  %v1306 = vunpack.c.h.b16 %v725
  %v1307 = vunpack.c.l.b16 %v726
  %v1308 = vunpack.c.h.b16 %v726
  %v1309 = vunpack.c.l.b16 %v727
  %v1310 = vunpack.c.l.b16 %v728
  %v1311 = vunpack.c.h.b16 %v728
  %v1312 = vunpack.c.l.b16 %v729
  %v1313 = vunpack.c.h.b16 %v729
  %v1314 = vunpack.c.l.b16 %v730
  %v1315 = vunpack.c.h.b16 %v730
  %v1316 = vunpack.c.l.b16 %v731
  %v1317 = vunpack.c.l.b16 %v732
  %v1318 = vunpack.c.h.b16 %v732
  %v1319 = vunpack.c.l.b16 %v733
  %v1320 = vunpack.c.h.b16 %v733
  %v1321 = vunpack.c.l.b16 %v734
  %v1322 = vunpack.c.h.b16 %v734
  %v1323 = vunpack.c.l.b16 %v735
  %v1324 = vunpack.c.l.b16 %v736
  %v1325 = vunpack.c.h.b16 %v736
  %v1326 = vunpack.c.l.b16 %v737
  %v1327 = vunpack.c.h.b16 %v737
  %v1328 = vunpack.c.l.b16 %v738
  %v1329 = vunpack.c.h.b16 %v738
  %v1330 = vunpack.c.l.b16 %v739
  %v1331 = vunpack.c.l.b16 %v740
  %v1332 = vunpack.c.h.b16 %v740
  %v1333 = vunpack.c.l.b16 %v741
  %v1334 = vunpack.c.h.b16 %v741
  %v1335 = vunpack.c.l.b16 %v742
  %v1336 = vunpack.c.h.b16 %v742
  %v1337 = vunpack.c.l.b16 %v743
  %v1338 = vunpack.c.l.b16 %v744
  %v1339 = vunpack.c.h.b16 %v744
  %v1340 = vunpack.c.l.b16 %v745
  %v1341 = vunpack.c.h.b16 %v745
  %v1342 = vunpack.c.l.b16 %v746
  %v1343 = vunpack.c.h.b16 %v746
  %v1344 = vunpack.c.l.b16 %v747
  %v1345 = vunpack.c.l.b16 %v748
  %v1346 = vunpack.c.h.b16 %v748
  %v1347 = vunpack.c.l.b16 %v749
  %v1348 = vunpack.c.h.b16 %v749
  %v1349 = vunpack.c.l.b16 %v750
  %v1350 = vunpack.c.h.b16 %v750
  %v1351 = vunpack.c.l.b16 %v751
  %v1352 = vunpack.c.l.b16 %v752
  %v1353 = vunpack.c.h.b16 %v752
  %v1354 = vunpack.c.l.b16 %v753
  %v1355 = vunpack.c.h.b16 %v753
  %v1356 = vunpack.c.l.b16 %v754
  %v1357 = vunpack.c.h.b16 %v754
  %v1358 = vunpack.c.l.b16 %v755
  %v1359 = vunpack.c.l.b16 %v756
  %v1360 = vunpack.c.h.b16 %v756
  %v1361 = vunpack.c.l.b16 %v757
  %v1362 = vunpack.c.h.b16 %v757
  %v1363 = vunpack.c.l.b16 %v758
  %v1364 = vunpack.c.h.b16 %v758
  %v1365 = vunpack.c.l.b16 %v759
  %v1366 = vunpack.c.l.b16 %v760
  %v1367 = vunpack.c.h.b16 %v760
  %v1368 = vunpack.c.l.b16 %v761
  %v1369 = vunpack.c.h.b16 %v761
  %v1370 = vunpack.c.l.b16 %v762
  %v1371 = vunpack.c.h.b16 %v762
  %v1372 = vunpack.c.l.b16 %v763
  %v1373 = vunpack.c.l.b16 %v764
  %v1374 = vunpack.c.h.b16 %v764
  %v1375 = vunpack.c.l.b16 %v765
  %v1376 = vunpack.c.h.b16 %v765
  %v1377 = vunpack.c.l.b16 %v766
  %v1378 = vunpack.c.h.b16 %v766
  %v1379 = vunpack.c.l.b16 %v767
  %v1380 = vunpack.c.l.b16 %v768
  %v1381 = vunpack.c.h.b16 %v768
  %v1382 = vunpack.c.l.b16 %v769
  %v1383 = vunpack.c.h.b16 %v769
  %v1384 = vunpack.c.l.b16 %v770
  %v1385 = vunpack.c.h.b16 %v770
  %v1386 = vunpack.c.l.b16 %v771
  %v1387 = vunpack.c.l.b16 %v772
  %v1388 = vunpack.c.h.b16 %v772
  %v1389 = vunpack.c.l.b16 %v773
  %v1390 = vunpack.c.h.b16 %v773
  %v1391 = vunpack.c.l.b16 %v774
  %v1392 = vunpack.c.h.b16 %v774
  %v1393 = vunpack.c.l.b16 %v775
  %v1394 = vunpack.c.l.b16 %v776
  %v1395 = vunpack.c.h.b16 %v776
  %v1396 = vunpack.c.l.b16 %v777
  %v1397 = vunpack.c.h.b16 %v777
  %v1398 = vunpack.c.l.b16 %v778
  %v1399 = vunpack.c.h.b16 %v778
  %v1400 = vunpack.c.l.b16 %v779
  %v1401 = vunpack.c.l.b16 %v780
  %v1402 = vunpack.c.h.b16 %v780
  %v1403 = vunpack.c.l.b16 %v781
  %v1404 = vunpack.c.h.b16 %v781
  %v1405 = vunpack.c.l.b16 %v782
  %v1406 = vunpack.c.h.b16 %v782
  %v1407 = vunpack.c.l.b16 %v783
  %v1408 = vunpack.c.l.b16 %v784
  %v1409 = vunpack.c.h.b16 %v784
  %v1410 = vunpack.c.l.b16 %v785
  %v1411 = vunpack.c.h.b16 %v785
  %v1412 = vunpack.c.l.b16 %v786
  %v1413 = vunpack.c.h.b16 %v786
  %v1414 = vunpack.c.l.b16 %v787
  %v1415 = vunpack.c.l.b16 %v788
  %v1416 = vunpack.c.h.b16 %v788
  %v1417 = vunpack.c.l.b16 %v789
  %v1418 = vunpack.c.h.b16 %v789
  %v1419 = vunpack.c.l.b16 %v790
  %v1420 = vunpack.c.h.b16 %v790
  %v1421 = vunpack.c.l.b16 %v791
  %v1422 = vunpack.c.l.b16 %v792
  %v1423 = vunpack.c.h.b16 %v792
  %v1424 = vunpack.c.l.b16 %v793
  %v1425 = vunpack.c.h.b16 %v793
  %v1426 = vunpack.c.l.b16 %v794
  %v1427 = vunpack.c.h.b16 %v794
  %v1428 = vunpack.c.l.b16 %v795
  %v1429 = vunpack.c.l.b16 %v796
  %v1430 = vunpack.c.h.b16 %v796
  %v1431 = vunpack.c.l.b16 %v797
  %v1432 = vunpack.c.h.b16 %v797
  %v1433 = vunpack.c.l.b16 %v798
  %v1434 = vunpack.c.h.b16 %v798
  %v1435 = vunpack.c.l.b16 %v799
  %v1436 = vunpack.c.l.b16 %v800
  %v1437 = vunpack.c.h.b16 %v800
  %v1438 = vunpack.c.l.b16 %v801
  %v1439 = vunpack.c.h.b16 %v801
  %v1440 = vunpack.c.l.b16 %v802
  %v1441 = vunpack.c.h.b16 %v802
  %v1442 = vunpack.c.l.b16 %v803
  %v1443 = vunpack.c.l.b16 %v804
  %v1444 = vunpack.c.h.b16 %v804
  %v1445 = vunpack.c.l.b16 %v805
  %v1446 = vunpack.c.h.b16 %v805
  %v1447 = vunpack.c.l.b16 %v806
  %v1448 = vunpack.c.h.b16 %v806
  %v1449 = vunpack.c.l.b16 %v807
  %v1450 = vunpack.c.l.b16 %v808
  %v1451 = vunpack.c.h.b16 %v808
  %v1452 = vunpack.c.l.b16 %v809
  %v1453 = vunpack.c.h.b16 %v809
  %v1454 = vunpack.c.l.b16 %v810
  %v1455 = vunpack.c.h.b16 %v810
  %v1456 = vunpack.c.l.b16 %v811
  %v1457 = vunpack.c.l.b16 %v812
  %v1458 = vunpack.c.h.b16 %v812
  %v1459 = vunpack.c.l.b16 %v813
  %v1460 = vunpack.c.h.b16 %v813
  %v1461 = vunpack.c.l.b16 %v814
  %v1462 = vunpack.c.h.b16 %v814
  %v1463 = vunpack.c.l.b16 %v815
  %v1464 = vunpack.c.l.b16 %v816
  %v1465 = vunpack.c.h.b16 %v816
  %v1466 = vunpack.c.l.b16 %v817
  %v1467 = vunpack.c.h.b16 %v817
  %v1468 = vunpack.c.l.b16 %v818
  %v1469 = vunpack.c.h.b16 %v818
  %v1470 = vunpack.c.l.b16 %v819
  %v1471 = vunpack.c.l.b16 %v820
  %v1472 = vunpack.c.h.b16 %v820
  %v1473 = vunpack.c.l.b16 %v821
  %v1474 = vunpack.c.h.b16 %v821
  %v1475 = vunpack.c.l.b16 %v822
  %v1476 = vunpack.c.h.b16 %v822
  %v1477 = vunpack.c.l.b16 %v823
  %v1478 = vunpack.c.l.b16 %v824
  %v1479 = vunpack.c.h.b16 %v824
  %v1480 = vunpack.c.l.b16 %v825
  %v1481 = vunpack.c.h.b16 %v825
  %v1482 = vunpack.c.l.b16 %v826
  %v1483 = vunpack.c.h.b16 %v826
  %v1484 = vunpack.c.l.b16 %v827
  %v1485 = vunpack.c.l.b16 %v828
  %v1486 = vunpack.c.h.b16 %v828
  %v1487 = vunpack.c.l.b16 %v829
  %v1488 = vunpack.c.h.b16 %v829
  %v1489 = vunpack.c.l.b16 %v830
  %v1490 = vunpack.c.h.b16 %v830
  %v1491 = vunpack.c.l.b16 %v831
  %v1492 = vunpack.c.l.b16 %v832
  %v1493 = vunpack.c.h.b16 %v832
  %v1494 = vunpack.c.l.b16 %v833
  %v1495 = vunpack.c.h.b16 %v833
  %v1496 = vunpack.c.l.b16 %v834
  %v1497 = vunpack.c.h.b16 %v834
  %v1498 = vunpack.c.l.b16 %v835
  %v1499 = vunpack.c.l.b16 %v836
  %v1500 = vunpack.c.h.b16 %v836
  %v1501 = vunpack.c.l.b16 %v837
  %v1502 = vunpack.c.h.b16 %v837
  %v1503 = vunpack.c.l.b16 %v838
  %v1504 = vunpack.c.h.b16 %v838
  %v1505 = vunpack.c.l.b16 %v839
  %v1506 = vunpack.c.l.b16 %v840
  %v1507 = vunpack.c.h.b16 %v840
  %v1508 = vunpack.c.l.b16 %v841
  %v1509 = vunpack.c.h.b16 %v841
  %v1510 = vunpack.c.l.b16 %v842
  %v1511 = vunpack.c.h.b16 %v842
  %v1512 = vunpack.c.l.b16 %v843
  %v1513 = vunpack.c.l.b16 %v844
  %v1514 = vunpack.c.h.b16 %v844
  %v1515 = vunpack.c.l.b16 %v845
  %v1516 = vunpack.c.h.b16 %v845
  %v1517 = vunpack.c.l.b16 %v846
  %v1518 = vunpack.c.h.b16 %v846
  %v1519 = vunpack.c.l.b16 %v847
  %v1520 = vunpack.c.l.b16 %v848
  %v1521 = vunpack.c.h.b16 %v848
  %v1522 = vunpack.c.l.b16 %v849
  %v1523 = vunpack.c.h.b16 %v849
  %v1524 = vunpack.c.l.b16 %v850
  %v1525 = vunpack.c.h.b16 %v850
  %v1526 = vunpack.c.l.b16 %v851
  %v1527 = vunpack.c.l.b16 %v852
  %v1528 = vunpack.c.h.b16 %v852
  %v1529 = vunpack.c.l.b16 %v853
  %v1530 = vunpack.c.h.b16 %v853
  %v1531 = vunpack.c.l.b16 %v854
  %v1532 = vunpack.c.h.b16 %v854
  %v1533 = vunpack.c.l.b16 %v855
  %v1534 = vunpack.c.l.b16 %v856
  %v1535 = vunpack.c.h.b16 %v856
  %v1536 = vunpack.c.l.b16 %v857
  %v1537 = vunpack.c.h.b16 %v857
  %v1538 = vunpack.c.l.b16 %v858
  %v1539 = vunpack.c.h.b16 %v858
  %v1540 = vunpack.c.l.b16 %v859
  %v1541 = vunpack.c.l.b16 %v860
  %v1542 = vunpack.c.h.b16 %v860
  %v1543 = vunpack.c.l.b16 %v861
  %v1544 = vunpack.c.h.b16 %v861
  %v1545 = vunpack.c.l.b16 %v862
  %v1546 = vunpack.c.h.b16 %v862
  %v1547 = vunpack.c.l.b16 %v863
  %v1548 = vunpack.c.l.b16 %v864
  %v1549 = vunpack.c.h.b16 %v864
  %v1550 = vunpack.c.l.b16 %v865
  %v1551 = vunpack.c.h.b16 %v865
  %v1552 = vunpack.c.l.b16 %v866
  %v1553 = vunpack.c.h.b16 %v866
  %v1554 = vunpack.c.l.b16 %v867
  %v1555 = vunpack.c.l.b16 %v868
  %v1556 = vunpack.c.h.b16 %v868
  %v1557 = vunpack.c.l.b16 %v869
  %v1558 = vunpack.c.h.b16 %v869
  %v1559 = vunpack.c.l.b16 %v870
  %v1560 = vunpack.c.h.b16 %v870
  %v1561 = vunpack.c.l.b16 %v871
  %v1562 = vunpack.c.l.b16 %v872
  %v1563 = vunpack.c.h.b16 %v872
  %v1564 = vunpack.c.l.b16 %v873
  %v1565 = vunpack.c.h.b16 %v873
  %v1566 = vunpack.c.l.b16 %v874
  %v1567 = vunpack.c.h.b16 %v874
  %v1568 = vunpack.c.l.b16 %v875
  %v1569 = vunpack.c.l.b16 %v876
  %v1570 = vunpack.c.h.b16 %v876
  %v1571 = vunpack.c.l.b16 %v877
  %v1572 = vunpack.c.h.b16 %v877
  %v1573 = vunpack.c.l.b16 %v878
  %v1574 = vunpack.c.h.b16 %v878
  %v1575 = vunpack.c.l.b16 %v879
  %v1576 = vunpack.c.l.b16 %v880
  %v1577 = vunpack.c.h.b16 %v880
  %v1578 = vunpack.c.l.b16 %v881
  %v1579 = vunpack.c.h.b16 %v881
  %v1580 = vunpack.c.l.b16 %v882
  %v1581 = vunpack.c.h.b16 %v882
  %v1582 = vunpack.c.l.b16 %v883
  %v1583 = vunpack.c.l.b16 %v884
  %v1584 = vunpack.c.h.b16 %v884
  %v1585 = vunpack.c.l.b16 %v885
  %v1586 = vunpack.c.h.b16 %v885
  %v1587 = vunpack.c.l.b16 %v886
  %v1588 = vunpack.c.h.b16 %v886
  %v1589 = vunpack.c.l.b16 %v887
  %v1590 = vunpack.c.l.b16 %v888
  %v1591 = vunpack.c.h.b16 %v888
  %v1592 = vunpack.c.l.b16 %v889
  %v1593 = vunpack.c.h.b16 %v889
  %v1594 = vunpack.c.l.b16 %v890
  %v1595 = vunpack.c.h.b16 %v890
  %v1596 = vunpack.c.l.b16 %v891
  %v1597 = vunpack.c.l.b16 %v892
  %v1598 = vunpack.c.h.b16 %v892
  %v1599 = vunpack.c.l.b16 %v893
  %v1600 = vunpack.c.h.b16 %v893
  %v1601 = vunpack.c.l.b16 %v894
  %v1602 = vunpack.c.h.b16 %v894
  %v1603 = vunpack.c.l.b16 %v895
  %v1604 = vunpack.c.l.b16 %v896
  %v1605 = vunpack.c.h.b16 %v896
  %v1606 = vunpack.c.l.b16 %v897
  %v1607 = vunpack.c.h.b16 %v897
  %v1608 = vunpack.c.l.b16 %v898
  %v1609 = vunpack.c.h.b16 %v898
  %v1610 = vunpack.c.l.b16 %v899
  %v1611 = vunpack.c.l.b16 %v900
  %v1612 = vunpack.c.h.b16 %v900
  %v1613 = vunpack.c.l.b16 %v901
  %v1614 = vunpack.c.h.b16 %v901
  %v1615 = vunpack.c.l.b16 %v902
  %v1616 = vunpack.c.h.b16 %v902
  %v1617 = vunpack.c.l.b16 %v903
  %v1618 = vunpack.c.l.b16 %v904
  %v1619 = vunpack.c.h.b16 %v904
  %v1620 = vunpack.c.l.b16 %v905
  %v1621 = vunpack.c.h.b16 %v905
  %v1622 = vunpack.c.l.b16 %v906
  %v1623 = vunpack.c.h.b16 %v906
  %v1624 = vunpack.c.l.b16 %v907
  %v1625 = vunpack.c.l.b16 %v908
  %v1626 = vunpack.c.h.b16 %v908
  %v1627 = vunpack.c.l.b16 %v909
  %v1628 = vunpack.c.h.b16 %v909
  %v1629 = vunpack.c.l.b16 %v910
  %v1630 = vunpack.c.h.b16 %v910
  %v1631 = vunpack.c.l.b16 %v911
  %v1632 = vunpack.c.l.b16 %v912
  %v1633 = vunpack.c.h.b16 %v912
  %v1634 = vunpack.c.l.b16 %v913
  %v1635 = vunpack.c.h.b16 %v913
  %v1636 = vunpack.c.l.b16 %v914
  %v1637 = vunpack.c.h.b16 %v914
  %v1638 = vunpack.c.l.b16 %v915
  %v1639 = vunpack.c.l.b16 %v916
  %v1640 = vunpack.c.h.b16 %v916
  %v1641 = vunpack.c.l.b16 %v917
  %v1642 = vunpack.c.h.b16 %v917
  %v1643 = vunpack.c.l.b16 %v918
  %v1644 = vunpack.c.h.b16 %v918
  %v1645 = vunpack.c.l.b16 %v919
  %v1646 = vunpack.c.l.b16 %v920
  %v1647 = vunpack.c.h.b16 %v920
  %v1648 = vunpack.c.l.b16 %v921
  %v1649 = vunpack.c.h.b16 %v921
  %v1650 = vunpack.c.l.b16 %v922
  %v1651 = vunpack.c.h.b16 %v922
  %v1652 = vunpack.c.l.b16 %v923
  %v1653 = vunpack.c.l.b16 %v924
  %v1654 = vunpack.c.h.b16 %v924
  %v1655 = vunpack.c.l.b16 %v925
  %v1656 = vunpack.c.h.b16 %v925
  %v1657 = vunpack.c.l.b16 %v926
  %v1658 = vunpack.c.h.b16 %v926
  %v1659 = vunpack.c.l.b16 %v927
  %v1660 = vunpack.c.l.b16 %v928
  %v1661 = vunpack.c.h.b16 %v928
  %v1662 = vunpack.c.l.b16 %v929
  %v1663 = vunpack.c.h.b16 %v929
  %v1664 = vunpack.c.l.b16 %v930
  %v1665 = vunpack.c.h.b16 %v930
  %v1666 = vunpack.c.l.b16 %v931
  %v1667 = vunpack.c.l.b16 %v932
  %v1668 = vunpack.c.h.b16 %v932
  %v1669 = vunpack.c.l.b16 %v933
  %v1670 = vunpack.c.h.b16 %v933
  %v1671 = vunpack.c.l.b16 %v934
  %v1672 = vunpack.c.h.b16 %v934
  %v1673 = vunpack.c.l.b16 %v935
  %v1674 = vunpack.c.l.b16 %v936
  %v1675 = vunpack.c.h.b16 %v936
  %v1676 = vunpack.c.l.b16 %v937
  %v1677 = vunpack.c.h.b16 %v937
  %v1678 = vunpack.c.l.b16 %v938
  %v1679 = vunpack.c.h.b16 %v938
  %v1680 = vunpack.c.l.b16 %v939
  %v1681 = vpack.c.b16 %v1240, %v1233
  %v1682 = vpack.c.b16 %v1241, %v1234
  %v1683 = vpack.c.b16 %v1242, %v1235
  %v1684 = vpack.c.b16 %v1243, %v1236
  %v1685 = vpack.c.b16 %v1244, %v1237
  %v1686 = vpack.c.b16 %v1245, %v1238
  %v1687 = vpack.c.b16 %v1246, %v1239
  %v1688 = vpack.c.b16 %v1254, %v1247
  %v1689 = vpack.c.b16 %v1255, %v1248
  %v1690 = vpack.c.b16 %v1256, %v1249
  %v1691 = vpack.c.b16 %v1257, %v1250
  %v1692 = vpack.c.b16 %v1258, %v1251
  %v1693 = vpack.c.b16 %v1259, %v1252
  %v1694 = vpack.c.b16 %v1260, %v1253
  %v1695 = vpack.c.b16 %v1268, %v1261
  %v1696 = vpack.c.b16 %v1269, %v1262
  %v1697 = vpack.c.b16 %v1270, %v1263
  %v1698 = vpack.c.b16 %v1271, %v1264
  %v1699 = vpack.c.b16 %v1272, %v1265
  %v1700 = vpack.c.b16 %v1273, %v1266
  %v1701 = vpack.c.b16 %v1274, %v1267
  %v1702 = vpack.c.b16 %v1282, %v1275
  %v1703 = vpack.c.b16 %v1283, %v1276
  %v1704 = vpack.c.b16 %v1284, %v1277
  %v1705 = vpack.c.b16 %v1285, %v1278
  %v1706 = vpack.c.b16 %v1286, %v1279
  %v1707 = vpack.c.b16 %v1287, %v1280
  %v1708 = vpack.c.b16 %v1288, %v1281
  %v1709 = vpack.c.b16 %v1296, %v1289
  %v1710 = vpack.c.b16 %v1297, %v1290
  %v1711 = vpack.c.b16 %v1298, %v1291
  %v1712 = vpack.c.b16 %v1299, %v1292
  %v1713 = vpack.c.b16 %v1300, %v1293
  %v1714 = vpack.c.b16 %v1301, %v1294
  %v1715 = vpack.c.b16 %v1302, %v1295
  %v1716 = vpack.c.b16 %v1310, %v1303
  %v1717 = vpack.c.b16 %v1311, %v1304
  %v1718 = vpack.c.b16 %v1312, %v1305
  %v1719 = vpack.c.b16 %v1313, %v1306
  %v1720 = vpack.c.b16 %v1314, %v1307
  %v1721 = vpack.c.b16 %v1315, %v1308
  %v1722 = vpack.c.b16 %v1316, %v1309
  %v1723 = vpack.c.b16 %v1324, %v1317
  %v1724 = vpack.c.b16 %v1325, %v1318
  %v1725 = vpack.c.b16 %v1326, %v1319
  %v1726 = vpack.c.b16 %v1327, %v1320
  %v1727 = vpack.c.b16 %v1328, %v1321
  %v1728 = vpack.c.b16 %v1329, %v1322
  %v1729 = vpack.c.b16 %v1330, %v1323
  %v1730 = vpack.c.b16 %v1338, %v1331
  %v1731 = vpack.c.b16 %v1339, %v1332
  %v1732 = vpack.c.b16 %v1340, %v1333
  %v1733 = vpack.c.b16 %v1341, %v1334
  %v1734 = vpack.c.b16 %v1342, %v1335
  %v1735 = vpack.c.b16 %v1343, %v1336
  %v1736 = vpack.c.b16 %v1344, %v1337
  %v1737 = vpack.c.b16 %v1352, %v1345
  %v1738 = vpack.c.b16 %v1353, %v1346
  %v1739 = vpack.c.b16 %v1354, %v1347
  %v1740 = vpack.c.b16 %v1355, %v1348
  %v1741 = vpack.c.b16 %v1356, %v1349
  %v1742 = vpack.c.b16 %v1357, %v1350
  %v1743 = vpack.c.b16 %v1358, %v1351
  %v1744 = vpack.c.b16 %v1366, %v1359
  %v1745 = vpack.c.b16 %v1367, %v1360
  %v1746 = vpack.c.b16 %v1368, %v1361
  %v1747 = vpack.c.b16 %v1369, %v1362
  %v1748 = vpack.c.b16 %v1370, %v1363
  %v1749 = vpack.c.b16 %v1371, %v1364
  %v1750 = vpack.c.b16 %v1372, %v1365
  %v1751 = vpack.c.b16 %v1380, %v1373
  %v1752 = vpack.c.b16 %v1381, %v1374
  %v1753 = vpack.c.b16 %v1382, %v1375
  %v1754 = vpack.c.b16 %v1383, %v1376
  %v1755 = vpack.c.b16 %v1384, %v1377
  %v1756 = vpack.c.b16 %v1385, %v1378
  %v1757 = vpack.c.b16 %v1386, %v1379
  %v1758 = vpack.c.b16 %v1394, %v1387
  %v1759 = vpack.c.b16 %v1395, %v1388
  %v1760 = vpack.c.b16 %v1396, %v1389
  %v1761 = vpack.c.b16 %v1397, %v1390
  %v1762 = vpack.c.b16 %v1398, %v1391
  %v1763 = vpack.c.b16 %v1399, %v1392
  %v1764 = vpack.c.b16 %v1400, %v1393
  %v1765 = vpack.c.b16 %v1408, %v1401
  %v1766 = vpack.c.b16 %v1409, %v1402
  %v1767 = vpack.c.b16 %v1410, %v1403
  %v1768 = vpack.c.b16 %v1411, %v1404
  %v1769 = vpack.c.b16 %v1412, %v1405
  %v1770 = vpack.c.b16 %v1413, %v1406
  %v1771 = vpack.c.b16 %v1414, %v1407
  %v1772 = vpack.c.b16 %v1422, %v1415
  %v1773 = vpack.c.b16 %v1423, %v1416
  %v1774 = vpack.c.b16 %v1424, %v1417
  %v1775 = vpack.c.b16 %v1425, %v1418
  %v1776 = vpack.c.b16 %v1426, %v1419
  %v1777 = vpack.c.b16 %v1427, %v1420
  %v1778 = vpack.c.b16 %v1428, %v1421
  %v1779 = vpack.c.b16 %v1436, %v1429
  %v1780 = vpack.c.b16 %v1437, %v1430
  %v1781 = vpack.c.b16 %v1438, %v1431
  %v1782 = vpack.c.b16 %v1439, %v1432
  %v1783 = vpack.c.b16 %v1440, %v1433
  %v1784 = vpack.c.b16 %v1441, %v1434
  %v1785 = vpack.c.b16 %v1442, %v1435
  %v1786 = vpack.c.b16 %v1450, %v1443
  %v1787 = vpack.c.b16 %v1451, %v1444
  %v1788 = vpack.c.b16 %v1452, %v1445
  %v1789 = vpack.c.b16 %v1453, %v1446
  %v1790 = vpack.c.b16 %v1454, %v1447
  %v1791 = vpack.c.b16 %v1455, %v1448
  %v1792 = vpack.c.b16 %v1456, %v1449
  %v1793 = vpack.c.b16 %v1464, %v1457
  %v1794 = vpack.c.b16 %v1465, %v1458
  %v1795 = vpack.c.b16 %v1466, %v1459
  %v1796 = vpack.c.b16 %v1467, %v1460
  %v1797 = vpack.c.b16 %v1468, %v1461
  %v1798 = vpack.c.b16 %v1469, %v1462
  %v1799 = vpack.c.b16 %v1470, %v1463
  %v1800 = vpack.c.b16 %v1478, %v1471
  %v1801 = vpack.c.b16 %v1479, %v1472
  %v1802 = vpack.c.b16 %v1480, %v1473
  %v1803 = vpack.c.b16 %v1481, %v1474
  %v1804 = vpack.c.b16 %v1482, %v1475
  %v1805 = vpack.c.b16 %v1483, %v1476
  %v1806 = vpack.c.b16 %v1484, %v1477
  %v1807 = vpack.c.b16 %v1492, %v1485
  %v1808 = vpack.c.b16 %v1493, %v1486
  %v1809 = vpack.c.b16 %v1494, %v1487
  %v1810 = vpack.c.b16 %v1495, %v1488
  %v1811 = vpack.c.b16 %v1496, %v1489
  %v1812 = vpack.c.b16 %v1497, %v1490
  %v1813 = vpack.c.b16 %v1498, %v1491
  %v1814 = vpack.c.b16 %v1506, %v1499
  %v1815 = vpack.c.b16 %v1507, %v1500
  %v1816 = vpack.c.b16 %v1508, %v1501
  %v1817 = vpack.c.b16 %v1509, %v1502
  %v1818 = vpack.c.b16 %v1510, %v1503
  %v1819 = vpack.c.b16 %v1511, %v1504
  %v1820 = vpack.c.b16 %v1512, %v1505
  %v1821 = vpack.c.b16 %v1520, %v1513
  %v1822 = vpack.c.b16 %v1521, %v1514
  %v1823 = vpack.c.b16 %v1522, %v1515
  %v1824 = vpack.c.b16 %v1523, %v1516
  %v1825 = vpack.c.b16 %v1524, %v1517
  %v1826 = vpack.c.b16 %v1525, %v1518
  %v1827 = vpack.c.b16 %v1526, %v1519
  %v1828 = vpack.c.b16 %v1534, %v1527
  %v1829 = vpack.c.b16 %v1535, %v1528
  %v1830 = vpack.c.b16 %v1536, %v1529
  %v1831 = vpack.c.b16 %v1537, %v1530
  %v1832 = vpack.c.b16 %v1538, %v1531
  %v1833 = vpack.c.b16 %v1539, %v1532
  %v1834 = vpack.c.b16 %v1540, %v1533
  %v1835 = vpack.c.b16 %v1548, %v1541
  %v1836 = vpack.c.b16 %v1549, %v1542
  %v1837 = vpack.c.b16 %v1550, %v1543
  %v1838 = vpack.c.b16 %v1551, %v1544
  %v1839 = vpack.c.b16 %v1552, %v1545
  %v1840 = vpack.c.b16 %v1553, %v1546
  %v1841 = vpack.c.b16 %v1554, %v1547
  %v1842 = vpack.c.b16 %v1562, %v1555
  %v1843 = vpack.c.b16 %v1563, %v1556
  %v1844 = vpack.c.b16 %v1564, %v1557
  %v1845 = vpack.c.b16 %v1565, %v1558
  %v1846 = vpack.c.b16 %v1566, %v1559
  %v1847 = vpack.c.b16 %v1567, %v1560
  %v1848 = vpack.c.b16 %v1568, %v1561
  %v1849 = vpack.c.b16 %v1576, %v1569
  %v1850 = vpack.c.b16 %v1577, %v1570
  %v1851 = vpack.c.b16 %v1578, %v1571
  %v1852 = vpack.c.b16 %v1579, %v1572
  %v1853 = vpack.c.b16 %v1580, %v1573
  %v1854 = vpack.c.b16 %v1581, %v1574
  %v1855 = vpack.c.b16 %v1582, %v1575
  %v1856 = vpack.c.b16 %v1590, %v1583
  %v1857 = vpack.c.b16 %v1591, %v1584
  %v1858 = vpack.c.b16 %v1592, %v1585
  %v1859 = vpack.c.b16 %v1593, %v1586
  %v1860 = vpack.c.b16 %v1594, %v1587
  %v1861 = vpack.c.b16 %v1595, %v1588
  %v1862 = vpack.c.b16 %v1596, %v1589
  %v1863 = vpack.c.b16 %v1604, %v1597
  %v1864 = vpack.c.b16 %v1605, %v1598
  %v1865 = vpack.c.b16 %v1606, %v1599
  %v1866 = vpack.c.b16 %v1607, %v1600
  %v1867 = vpack.c.b16 %v1608, %v1601
  %v1868 = vpack.c.b16 %v1609, %v1602
  %v1869 = vpack.c.b16 %v1610, %v1603
  %v1870 = vpack.c.b16 %v1618, %v1611
  %v1871 = vpack.c.b16 %v1619, %v1612
  %v1872 = vpack.c.b16 %v1620, %v1613
  %v1873 = vpack.c.b16 %v1621, %v1614
  %v1874 = vpack.c.b16 %v1622, %v1615
  %v1875 = vpack.c.b16 %v1623, %v1616
  %v1876 = vpack.c.b16 %v1624, %v1617
  %v1877 = vpack.c.b16 %v1632, %v1625
  %v1878 = vpack.c.b16 %v1633, %v1626
  %v1879 = vpack.c.b16 %v1634, %v1627
  %v1880 = vpack.c.b16 %v1635, %v1628
  %v1881 = vpack.c.b16 %v1636, %v1629
  %v1882 = vpack.c.b16 %v1637, %v1630
  %v1883 = vpack.c.b16 %v1638, %v1631
  %v1884 = vpack.c.b16 %v1646, %v1639
  %v1885 = vpack.c.b16 %v1647, %v1640
  %v1886 = vpack.c.b16 %v1648, %v1641
  %v1887 = vpack.c.b16 %v1649, %v1642
  %v1888 = vpack.c.b16 %v1650, %v1643
  %v1889 = vpack.c.b16 %v1651, %v1644
  %v1890 = vpack.c.b16 %v1652, %v1645
  %v1891 = vpack.c.b16 %v1660, %v1653
  %v1892 = vpack.c.b16 %v1661, %v1654
  %v1893 = vpack.c.b16 %v1662, %v1655
  %v1894 = vpack.c.b16 %v1663, %v1656
  %v1895 = vpack.c.b16 %v1664, %v1657
  %v1896 = vpack.c.b16 %v1665, %v1658
  %v1897 = vpack.c.b16 %v1666, %v1659
  %v1898 = vpack.c.b16 %v1674, %v1667
  %v1899 = vpack.c.b16 %v1675, %v1668
  %v1900 = vpack.c.b16 %v1676, %v1669
  %v1901 = vpack.c.b16 %v1677, %v1670
  %v1902 = vpack.c.b16 %v1678, %v1671
  %v1903 = vpack.c.b16 %v1679, %v1672
  %v1904 = vpack.c.b16 %v1680, %v1673
  %2129 = vmatprep.subr.bf16.mxu0 %v1731
  %2130 = vmatpush1.bf16.msra.mxu0 %v1730
  %2131 = vmatprep.subr.bf16.mxu0 %v1724
  %2132 = vmatpush1.bf16.msra.mxu0 %v1723
  %2133 = vmatprep.subr.bf16.mxu0 %v1717
  %2134 = vmatpush1.bf16.msra.mxu0 %v1716
  %2135 = vmatprep.subr.bf16.mxu0 %v1710
  %2136 = vmatpush1.bf16.msra.mxu0 %v1709
  %2137 = vmatprep.subr.bf16.mxu0 %v1703
  %2138 = vmatpush1.bf16.msra.mxu0 %v1702
  %2139 = vmatprep.subr.bf16.mxu0 %v1696
  %2140 = vmatpush1.bf16.msra.mxu0 %v1695
  %2141 = vmatprep.subr.bf16.mxu0 %v1689
  %2142 = vmatpush1.bf16.msra.mxu0 %v1688
  %2143 = vmatprep.subr.bf16.mxu0 %v1682
  %2144 = vmatpush1.bf16.msra.mxu0 %v1681
  %2145 = vmatprep.subr.bf16.mxu0 %v1787
  %2146 = vmatpush2.bf16.msra.mxu0 %v1786
  %2147 = vmatprep.subr.bf16.mxu0 %v1780
  %2148 = vmatpush2.bf16.msra.mxu0 %v1779
  %2149 = vmatprep.subr.bf16.mxu0 %v1773
  %2150 = vmatpush2.bf16.msra.mxu0 %v1772
  %2151 = vmatprep.subr.bf16.mxu0 %v1766
  %2152 = vmatpush2.bf16.msra.mxu0 %v1765
  %2153 = vmatprep.subr.bf16.mxu0 %v1759
  %2154 = vmatpush2.bf16.msra.mxu0 %v1758
  %2155 = vmatprep.subr.bf16.mxu0 %v1752
  %2156 = vmatpush2.bf16.msra.mxu0 %v1751
  %2157 = vmatprep.subr.bf16.mxu0 %v1745
  %2158 = vmatpush2.bf16.msra.mxu0 %v1744
  %2159 = vmatprep.subr.bf16.mxu0 %v1738
  %2160 = vmatpush2.bf16.msra.mxu0 %v1737
  %2161 = vmatprep.mubr.bf16.mxu0 %v681
  %2162 = vmatmul.mubr.bf16.gmra.mxu0 %v680
  %v2163 = vpop.f32.mrf.mxu0
  %v2164 = vadd.f32 %v945, %v2163
  %v2165 = vpop.f32.mrf.mxu0
  %v2166 = vadd.f32 %v949, %v2165
  %v2167 = vpop.f32.mrf.mxu0
  %v2168 = vadd.f32 %v945, %v2167
  %v2169 = vpop.f32.mrf.mxu0
  %v2170 = vadd.f32 %v949, %v2169
  %2171 = vdwg.mxu0
  %2172 = vmatprep.subr.bf16.mxu0 %v1843
  %2173 = vmatpush1.bf16.msra.mxu0 %v1842
  %2174 = vmatprep.subr.bf16.mxu0 %v1836
  %2175 = vmatpush1.bf16.msra.mxu0 %v1835
  %2176 = vmatprep.subr.bf16.mxu0 %v1829
  %2177 = vmatpush1.bf16.msra.mxu0 %v1828
  %2178 = vmatprep.subr.bf16.mxu0 %v1822
  %2179 = vmatpush1.bf16.msra.mxu0 %v1821
  %2180 = vmatprep.subr.bf16.mxu0 %v1815
  %2181 = vmatpush1.bf16.msra.mxu0 %v1814
  %2182 = vmatprep.subr.bf16.mxu0 %v1808
  %2183 = vmatpush1.bf16.msra.mxu0 %v1807
  %2184 = vmatprep.subr.bf16.mxu0 %v1801
  %2185 = vmatpush1.bf16.msra.mxu0 %v1800
  %2186 = vmatprep.subr.bf16.mxu0 %v1794
  %2187 = vmatpush1.bf16.msra.mxu0 %v1793
  %2188 = vmatprep.subr.bf16.mxu0 %v1899
  %2189 = vmatpush2.bf16.msra.mxu0 %v1898
  %2190 = vmatprep.subr.bf16.mxu0 %v1892
  %2191 = vmatpush2.bf16.msra.mxu0 %v1891
  %2192 = vmatprep.subr.bf16.mxu0 %v1885
  %2193 = vmatpush2.bf16.msra.mxu0 %v1884
  %2194 = vmatprep.subr.bf16.mxu0 %v1878
  %2195 = vmatpush2.bf16.msra.mxu0 %v1877
  %2196 = vmatprep.subr.bf16.mxu0 %v1871
  %2197 = vmatpush2.bf16.msra.mxu0 %v1870
  %2198 = vmatprep.subr.bf16.mxu0 %v1864
  %2199 = vmatpush2.bf16.msra.mxu0 %v1863
  %2200 = vmatprep.subr.bf16.mxu0 %v1857
  %2201 = vmatpush2.bf16.msra.mxu0 %v1856
  %2202 = vmatprep.subr.bf16.mxu0 %v1850
  %2203 = vmatpush2.bf16.msra.mxu0 %v1849
  %2204 = vmatprep.mubr.bf16.mxu0 %v683
  %2205 = vmatmul.mubr.bf16.gmra.mxu0 %v682
  %v2206 = vpop.f32.mrf.mxu0
  %v2207 = vadd.f32 %v2164, %v2206
  %v2208 = vpop.f32.mrf.mxu0
  %v2209 = vadd.f32 %v2166, %v2208
  %v2210 = vpop.f32.mrf.mxu0
  %v2211 = vadd.f32 %v2168, %v2210
  %v2212 = vpop.f32.mrf.mxu0
  %v2213 = vadd.f32 %v2170, %v2212
  %2214 = vdwg.mxu0
  %2215 = vmatprep.subr.bf16.mxu0 %v1733
  %2216 = vmatpush1.bf16.msra.mxu0 %v1732
  %2217 = vmatprep.subr.bf16.mxu0 %v1726
  %2218 = vmatpush1.bf16.msra.mxu0 %v1725
  %2219 = vmatprep.subr.bf16.mxu0 %v1719
  %2220 = vmatpush1.bf16.msra.mxu0 %v1718
  %2221 = vmatprep.subr.bf16.mxu0 %v1712
  %2222 = vmatpush1.bf16.msra.mxu0 %v1711
  %2223 = vmatprep.subr.bf16.mxu0 %v1705
  %2224 = vmatpush1.bf16.msra.mxu0 %v1704
  %2225 = vmatprep.subr.bf16.mxu0 %v1698
  %2226 = vmatpush1.bf16.msra.mxu0 %v1697
  %2227 = vmatprep.subr.bf16.mxu0 %v1691
  %2228 = vmatpush1.bf16.msra.mxu0 %v1690
  %2229 = vmatprep.subr.bf16.mxu0 %v1684
  %2230 = vmatpush1.bf16.msra.mxu0 %v1683
  %2231 = vmatprep.subr.bf16.mxu0 %v1789
  %2232 = vmatpush2.bf16.msra.mxu0 %v1788
  %2233 = vmatprep.subr.bf16.mxu0 %v1782
  %2234 = vmatpush2.bf16.msra.mxu0 %v1781
  %2235 = vmatprep.subr.bf16.mxu0 %v1775
  %2236 = vmatpush2.bf16.msra.mxu0 %v1774
  %2237 = vmatprep.subr.bf16.mxu0 %v1768
  %2238 = vmatpush2.bf16.msra.mxu0 %v1767
  %2239 = vmatprep.subr.bf16.mxu0 %v1761
  %2240 = vmatpush2.bf16.msra.mxu0 %v1760
  %2241 = vmatprep.subr.bf16.mxu0 %v1754
  %2242 = vmatpush2.bf16.msra.mxu0 %v1753
  %2243 = vmatprep.subr.bf16.mxu0 %v1747
  %2244 = vmatpush2.bf16.msra.mxu0 %v1746
  %2245 = vmatprep.subr.bf16.mxu0 %v1740
  %2246 = vmatpush2.bf16.msra.mxu0 %v1739
  %2247 = vmatprep.mubr.bf16.mxu0 %v681
  %2248 = vmatmul.mubr.bf16.gmra.mxu0 %v680
  %v2249 = vpop.f32.mrf.mxu0
  %v2250 = vadd.f32 %v953, %v2249
  %v2251 = vpop.f32.mrf.mxu0
  %v2252 = vadd.f32 %v957, %v2251
  %v2253 = vpop.f32.mrf.mxu0
  %v2254 = vadd.f32 %v953, %v2253
  %v2255 = vpop.f32.mrf.mxu0
  %v2256 = vadd.f32 %v957, %v2255
  %2257 = vdwg.mxu0
  %2258 = vmatprep.subr.bf16.mxu0 %v1845
  %2259 = vmatpush1.bf16.msra.mxu0 %v1844
  %2260 = vmatprep.subr.bf16.mxu0 %v1838
  %2261 = vmatpush1.bf16.msra.mxu0 %v1837
  %2262 = vmatprep.subr.bf16.mxu0 %v1831
  %2263 = vmatpush1.bf16.msra.mxu0 %v1830
  %2264 = vmatprep.subr.bf16.mxu0 %v1824
  %2265 = vmatpush1.bf16.msra.mxu0 %v1823
  %2266 = vmatprep.subr.bf16.mxu0 %v1817
  %2267 = vmatpush1.bf16.msra.mxu0 %v1816
  %2268 = vmatprep.subr.bf16.mxu0 %v1810
  %2269 = vmatpush1.bf16.msra.mxu0 %v1809
  %2270 = vmatprep.subr.bf16.mxu0 %v1803
  %2271 = vmatpush1.bf16.msra.mxu0 %v1802
  %2272 = vmatprep.subr.bf16.mxu0 %v1796
  %2273 = vmatpush1.bf16.msra.mxu0 %v1795
  %2274 = vmatprep.subr.bf16.mxu0 %v1901
  %2275 = vmatpush2.bf16.msra.mxu0 %v1900
  %2276 = vmatprep.subr.bf16.mxu0 %v1894
  %2277 = vmatpush2.bf16.msra.mxu0 %v1893
  %2278 = vmatprep.subr.bf16.mxu0 %v1887
  %2279 = vmatpush2.bf16.msra.mxu0 %v1886
  %2280 = vmatprep.subr.bf16.mxu0 %v1880
  %2281 = vmatpush2.bf16.msra.mxu0 %v1879
  %2282 = vmatprep.subr.bf16.mxu0 %v1873
  %2283 = vmatpush2.bf16.msra.mxu0 %v1872
  %2284 = vmatprep.subr.bf16.mxu0 %v1866
  %2285 = vmatpush2.bf16.msra.mxu0 %v1865
  %2286 = vmatprep.subr.bf16.mxu0 %v1859
  %2287 = vmatpush2.bf16.msra.mxu0 %v1858
  %2288 = vmatprep.subr.bf16.mxu0 %v1852
  %2289 = vmatpush2.bf16.msra.mxu0 %v1851
  %2290 = vmatprep.mubr.bf16.mxu0 %v683
  %2291 = vmatmul.mubr.bf16.gmra.mxu0 %v682
  %v2292 = vpop.f32.mrf.mxu0
  %v2293 = vadd.f32 %v2250, %v2292
  %v2294 = vpop.f32.mrf.mxu0
  %v2295 = vadd.f32 %v2252, %v2294
  %v2296 = vpop.f32.mrf.mxu0
  %v2297 = vadd.f32 %v2254, %v2296
  %v2298 = vpop.f32.mrf.mxu0
  %v2299 = vadd.f32 %v2256, %v2298
  %2300 = vdwg.mxu0
  %2301 = vmatprep.subr.bf16.mxu0 %v1735
  %2302 = vmatpush1.bf16.msra.mxu0 %v1734
  %2303 = vmatprep.subr.bf16.mxu0 %v1728
  %2304 = vmatpush1.bf16.msra.mxu0 %v1727
  %2305 = vmatprep.subr.bf16.mxu0 %v1721
  %2306 = vmatpush1.bf16.msra.mxu0 %v1720
  %2307 = vmatprep.subr.bf16.mxu0 %v1714
  %2308 = vmatpush1.bf16.msra.mxu0 %v1713
  %2309 = vmatprep.subr.bf16.mxu0 %v1707
  %2310 = vmatpush1.bf16.msra.mxu0 %v1706
  %2311 = vmatprep.subr.bf16.mxu0 %v1700
  %2312 = vmatpush1.bf16.msra.mxu0 %v1699
  %2313 = vmatprep.subr.bf16.mxu0 %v1693
  %2314 = vmatpush1.bf16.msra.mxu0 %v1692
  %2315 = vmatprep.subr.bf16.mxu0 %v1686
  %2316 = vmatpush1.bf16.msra.mxu0 %v1685
  %2317 = vmatprep.subr.bf16.mxu0 %v1791
  %2318 = vmatpush2.bf16.msra.mxu0 %v1790
  %2319 = vmatprep.subr.bf16.mxu0 %v1784
  %2320 = vmatpush2.bf16.msra.mxu0 %v1783
  %2321 = vmatprep.subr.bf16.mxu0 %v1777
  %2322 = vmatpush2.bf16.msra.mxu0 %v1776
  %2323 = vmatprep.subr.bf16.mxu0 %v1770
  %2324 = vmatpush2.bf16.msra.mxu0 %v1769
  %2325 = vmatprep.subr.bf16.mxu0 %v1763
  %2326 = vmatpush2.bf16.msra.mxu0 %v1762
  %2327 = vmatprep.subr.bf16.mxu0 %v1756
  %2328 = vmatpush2.bf16.msra.mxu0 %v1755
  %2329 = vmatprep.subr.bf16.mxu0 %v1749
  %2330 = vmatpush2.bf16.msra.mxu0 %v1748
  %2331 = vmatprep.subr.bf16.mxu0 %v1742
  %2332 = vmatpush2.bf16.msra.mxu0 %v1741
  %2333 = vmatprep.mubr.bf16.mxu0 %v681
  %2334 = vmatmul.mubr.bf16.gmra.mxu0 %v680
  %v2335 = vpop.f32.mrf.mxu0
  %v2336 = vadd.f32 %v961, %v2335
  %v2337 = vpop.f32.mrf.mxu0
  %v2338 = vadd.f32 %v965, %v2337
  %v2339 = vpop.f32.mrf.mxu0
  %v2340 = vadd.f32 %v961, %v2339
  %v2341 = vpop.f32.mrf.mxu0
  %v2342 = vadd.f32 %v965, %v2341
  %2343 = vdwg.mxu0
  %2344 = vmatprep.subr.bf16.mxu0 %v1847
  %2345 = vmatpush1.bf16.msra.mxu0 %v1846
  %2346 = vmatprep.subr.bf16.mxu0 %v1840
  %2347 = vmatpush1.bf16.msra.mxu0 %v1839
  %2348 = vmatprep.subr.bf16.mxu0 %v1833
  %2349 = vmatpush1.bf16.msra.mxu0 %v1832
  %2350 = vmatprep.subr.bf16.mxu0 %v1826
  %2351 = vmatpush1.bf16.msra.mxu0 %v1825
  %2352 = vmatprep.subr.bf16.mxu0 %v1819
  %2353 = vmatpush1.bf16.msra.mxu0 %v1818
  %2354 = vmatprep.subr.bf16.mxu0 %v1812
  %2355 = vmatpush1.bf16.msra.mxu0 %v1811
  %2356 = vmatprep.subr.bf16.mxu0 %v1805
  %2357 = vmatpush1.bf16.msra.mxu0 %v1804
  %2358 = vmatprep.subr.bf16.mxu0 %v1798
  %2359 = vmatpush1.bf16.msra.mxu0 %v1797
  %2360 = vmatprep.subr.bf16.mxu0 %v1903
  %2361 = vmatpush2.bf16.msra.mxu0 %v1902
  %2362 = vmatprep.subr.bf16.mxu0 %v1896
  %2363 = vmatpush2.bf16.msra.mxu0 %v1895
  %2364 = vmatprep.subr.bf16.mxu0 %v1889
  %2365 = vmatpush2.bf16.msra.mxu0 %v1888
  %2366 = vmatprep.subr.bf16.mxu0 %v1882
  %2367 = vmatpush2.bf16.msra.mxu0 %v1881
  %2368 = vmatprep.subr.bf16.mxu0 %v1875
  %2369 = vmatpush2.bf16.msra.mxu0 %v1874
  %2370 = vmatprep.subr.bf16.mxu0 %v1868
  %2371 = vmatpush2.bf16.msra.mxu0 %v1867
  %2372 = vmatprep.subr.bf16.mxu0 %v1861
  %2373 = vmatpush2.bf16.msra.mxu0 %v1860
  %2374 = vmatprep.subr.bf16.mxu0 %v1854
  %2375 = vmatpush2.bf16.msra.mxu0 %v1853
  %2376 = vmatprep.mubr.bf16.mxu0 %v683
  %2377 = vmatmul.mubr.bf16.gmra.mxu0 %v682
  %v2378 = vpop.f32.mrf.mxu0
  %v2379 = vadd.f32 %v2336, %v2378
  %v2380 = vpop.f32.mrf.mxu0
  %v2381 = vadd.f32 %v2338, %v2380
  %v2382 = vpop.f32.mrf.mxu0
  %v2383 = vadd.f32 %v2340, %v2382
  %v2384 = vpop.f32.mrf.mxu0
  %v2385 = vadd.f32 %v2342, %v2384
  %2386 = vdwg.mxu0
  %2387 = vmatprep.subr.bf16.mxu0 0
  %2388 = vmatpush1.bf16.msra.mxu0 %v1736
  %2389 = vmatprep.subr.bf16.mxu0 0
  %2390 = vmatpush1.bf16.msra.mxu0 %v1729
  %2391 = vmatprep.subr.bf16.mxu0 0
  %2392 = vmatpush1.bf16.msra.mxu0 %v1722
  %2393 = vmatprep.subr.bf16.mxu0 0
  %2394 = vmatpush1.bf16.msra.mxu0 %v1715
  %2395 = vmatprep.subr.bf16.mxu0 0
  %2396 = vmatpush1.bf16.msra.mxu0 %v1708
  %2397 = vmatprep.subr.bf16.mxu0 0
  %2398 = vmatpush1.bf16.msra.mxu0 %v1701
  %2399 = vmatprep.subr.bf16.mxu0 0
  %2400 = vmatpush1.bf16.msra.mxu0 %v1694
  %2401 = vmatprep.subr.bf16.mxu0 0
  %2402 = vmatpush1.bf16.msra.mxu0 %v1687
  %2403 = vmatprep.subr.bf16.mxu0 0
  %2404 = vmatpush2.bf16.msra.mxu0 %v1792
  %2405 = vmatprep.subr.bf16.mxu0 0
  %2406 = vmatpush2.bf16.msra.mxu0 %v1785
  %2407 = vmatprep.subr.bf16.mxu0 0
  %2408 = vmatpush2.bf16.msra.mxu0 %v1778
  %2409 = vmatprep.subr.bf16.mxu0 0
  %2410 = vmatpush2.bf16.msra.mxu0 %v1771
  %2411 = vmatprep.subr.bf16.mxu0 0
  %2412 = vmatpush2.bf16.msra.mxu0 %v1764
  %2413 = vmatprep.subr.bf16.mxu0 0
  %2414 = vmatpush2.bf16.msra.mxu0 %v1757
  %2415 = vmatprep.subr.bf16.mxu0 0
  %2416 = vmatpush2.bf16.msra.mxu0 %v1750
  %2417 = vmatprep.subr.bf16.mxu0 0
  %2418 = vmatpush2.bf16.msra.mxu0 %v1743
  %2419 = vmatprep.mubr.bf16.mxu0 %v681
  %2420 = vmatmul.mubr.bf16.gmra.mxu0 %v680
  %v2421 = vpop.f32.mrf.mxu0
  %v2422 = vadd.f32 %v969, %v2421
  %v2423 = vpop.f32.mrf.mxu0
  %v2424 = vpop.f32.mrf.mxu0
  %v2425 = vadd.f32 %v969, %v2424
  %v2426 = vpop.f32.mrf.mxu0
  %2427 = vdwg.mxu0
  %2428 = vmatprep.subr.bf16.mxu0 0
  %2429 = vmatpush1.bf16.msra.mxu0 %v1848
  %2430 = vmatprep.subr.bf16.mxu0 0
  %2431 = vmatpush1.bf16.msra.mxu0 %v1841
  %2432 = vmatprep.subr.bf16.mxu0 0
  %2433 = vmatpush1.bf16.msra.mxu0 %v1834
  %2434 = vmatprep.subr.bf16.mxu0 0
  %2435 = vmatpush1.bf16.msra.mxu0 %v1827
  %2436 = vmatprep.subr.bf16.mxu0 0
  %2437 = vmatpush1.bf16.msra.mxu0 %v1820
  %2438 = vmatprep.subr.bf16.mxu0 0
  %2439 = vmatpush1.bf16.msra.mxu0 %v1813
  %2440 = vmatprep.subr.bf16.mxu0 0
  %2441 = vmatpush1.bf16.msra.mxu0 %v1806
  %2442 = vmatprep.subr.bf16.mxu0 0
  %2443 = vmatpush1.bf16.msra.mxu0 %v1799
  %2444 = vmatprep.subr.bf16.mxu0 0
  %2445 = vmatpush2.bf16.msra.mxu0 %v1904
  %2446 = vmatprep.subr.bf16.mxu0 0
  %2447 = vmatpush2.bf16.msra.mxu0 %v1897
  %2448 = vmatprep.subr.bf16.mxu0 0
  %2449 = vmatpush2.bf16.msra.mxu0 %v1890
  %2450 = vmatprep.subr.bf16.mxu0 0
  %2451 = vmatpush2.bf16.msra.mxu0 %v1883
  %2452 = vmatprep.subr.bf16.mxu0 0
  %2453 = vmatpush2.bf16.msra.mxu0 %v1876
  %2454 = vmatprep.subr.bf16.mxu0 0
  %2455 = vmatpush2.bf16.msra.mxu0 %v1869
  %2456 = vmatprep.subr.bf16.mxu0 0
  %2457 = vmatpush2.bf16.msra.mxu0 %v1862
  %2458 = vmatprep.subr.bf16.mxu0 0
  %2459 = vmatpush2.bf16.msra.mxu0 %v1855
  %2460 = vmatprep.mubr.bf16.mxu0 %v683
  %2461 = vmatmul.mubr.bf16.gmra.mxu0 %v682
  %v2462 = vpop.f32.mrf.mxu0
  %v2463 = vadd.f32 %v2422, %v2462
  %v2464 = vpop.f32.mrf.mxu0
  %v2465 = vpop.f32.mrf.mxu0
  %v2466 = vadd.f32 %v2425, %v2465
  %v2467 = vpop.f32.mrf.mxu0
  %2468 = vdwg.mxu0
  %2469 = vst [vmem:[%s7] sm:$0xff] %v2207
  %2470 = vst [vmem:[%s7 + $0x8] sm:$0xff] %v2209
  %2471 = vst [vmem:[%s7 + $0x10] sm:$0xff] %v2293
  %2472 = vst [vmem:[%s7 + $0x18] sm:$0xff] %v2295
  %2473 = vst [vmem:[%s7 + $0x20] sm:$0xff] %v2379
  %2474 = vst [vmem:[%s7 + $0x28] sm:$0xff] %v2381
  %vm2475 = vcmask 130048
  %2476 = vst.msk [vmem:[%s7 + $0x30] sm:$0xff] %vm2475, %v2463
  %2477 = vst [vmem:[%s7 + $0x38] sm:$0xff] %v2211
  %2478 = vst [vmem:[%s7 + $0x40] sm:$0xff] %v2213
  %2479 = vst [vmem:[%s7 + $0x48] sm:$0xff] %v2297
  %2480 = vst [vmem:[%s7 + $0x50] sm:$0xff] %v2299
  %2481 = vst [vmem:[%s7 + $0x58] sm:$0xff] %v2383
  %2482 = vst [vmem:[%s7 + $0x60] sm:$0xff] %v2385
  %2483 = vst.msk [vmem:[%s7 + $0x68] sm:$0xff] %vm2475, %v2466
  // Predicated region
  $region30: #{decoder_forward.1} parent=0 // pred_check
    _
  $region31: #{decoder_forward.1} parent=0 // pred_check_branch
    %2485 = sbr.rel (0) target = $region33
  $region32: #{decoder_forward.1} parent=0 // pred_region
    _
  $region33: #{decoder_forward.1} parent=0 // pred_fallthru
    _
  // Predicated region
  $region34: #{decoder_forward.1} parent=0 // pred_check
    _
  $region35: #{decoder_forward.1} parent=0 // pred_check_branch
    %2487 = sbr.rel (0) target = $region37
  $region36: #{decoder_forward.1} parent=0 // pred_region
    _
  $region37: #{decoder_forward.1} parent=0 // pred_fallthru
    _

</llo_original>
